<compile_context>
chip_gen: v7x
topology: tpu7x:2x2x1
jax: 0.10.0
libtpu: 0.0.40
codegen_flags: <defaults>
</compile_context>

<pallas_src>
import functools

import jax
import jax.numpy as jnp
from jax import lax
from jax.experimental import pallas as pl
from jax.experimental.pallas import tpu as pltpu


# ---------------------------------------------------------------------------
# Fully fused forward kernel (no grid — whole problem lives in VMEM).
# ---------------------------------------------------------------------------
def _mhsa_fused_kernel(idx_ref, emb_ref, wqkv_ref, bqkv_ref,
                       wp_ref, bp_ref, wd_ref, bd_ref,
                       o_ref, x_scr, *, num_heads):
    BL, H = x_scr.shape
    B = o_ref.shape[0]
    L = BL // B
    V = emb_ref.shape[0]
    num_layers = wqkv_ref.shape[0]
    hd = H // num_heads
    scale = float(hd) ** -0.5

    # --- Embedding gather as a one-hot matmul (exact, MXU friendly). ---------
    ids = idx_ref[...]                                        # (BL, 1) int32
    iota = lax.broadcasted_iota(jnp.int32, (BL, V), 1)        # (BL, V)
    onehot = (ids == iota).astype(jnp.float32)
    x_scr[...] = jnp.dot(onehot, emb_ref[...],
                         preferred_element_type=jnp.float32)  # (BL, H) f32

    # --- num_mhsa_layer x (BertSelfAttention + tanh), x resident in VMEM. ----
    def layer_body(l, carry):
        x = x_scr[...]                                        # (BL, H) f32
        w = wqkv_ref[l]                                       # (H, 3H) bf16
        b = bqkv_ref[l]                                       # (1, 3H) f32
        # Single merged QKV projection over all B*L rows (bf16 x bf16 -> f32).
        qkv = (jnp.dot(x.astype(jnp.bfloat16), w,
                       preferred_element_type=jnp.float32) + b)      # (BL, 3H)
        qkv = qkv.reshape(B, L, 3 * H)                        # sublane-aligned split

        ctx_heads = []
        for h in range(num_heads):                            # static, small (NH=4)
            c0 = h * hd
            qh = qkv[:, :, c0:c0 + hd].astype(jnp.bfloat16)              # (B, L, hd)
            kh = qkv[:, :, H + c0:H + c0 + hd].astype(jnp.bfloat16)      # (B, L, hd)
            vh = qkv[:, :, 2 * H + c0:2 * H + c0 + hd].astype(jnp.bfloat16)
            # scores = qh @ kh^T batched over B (no materialized transpose).
            s = lax.dot_general(qh, kh, (((2,), (2,)), ((0,), (0,))),
                                preferred_element_type=jnp.float32) * scale  # (B,L,L)
            # attention_mask in the reference is all-zeros -> no-op.
            m = jnp.max(s, axis=-1, keepdims=True)
            e = jnp.exp(s - m)
            denom = jnp.sum(e, axis=-1, keepdims=True)
            p = e * pl.reciprocal(denom, approx=True)          # softmax (EUP recip)
            # dropout is identity in eval mode.
            ctx_heads.append(
                lax.dot_general(p.astype(jnp.bfloat16), vh,
                                (((2,), (1,)), ((0,), (0,))),
                                preferred_element_type=jnp.float32))  # (B, L, hd)

        ctx = jnp.concatenate(ctx_heads, axis=-1)             # (B, L, H) in-register
        # Encoder applies tanh; ONE lane-dense full-width store per layer.
        x_scr[...] = jnp.tanh(ctx).reshape(BL, H)
        return carry

    lax.fori_loop(0, num_layers, layer_body, 0)

    # --- BertPooler (first token, strided read) + final dense. ---------------
    x0 = x_scr[pl.ds(0, B, stride=L), :]                      # rows 0, L, 2L, ... -> (B, H)
    pooled = jnp.tanh(
        jnp.dot(x0.astype(jnp.bfloat16), wp_ref[...],
                preferred_element_type=jnp.float32) + bp_ref[...])
    o_ref[...] = (jnp.dot(pooled.astype(jnp.bfloat16), wd_ref[...],
                          preferred_element_type=jnp.float32) + bd_ref[...])


# ---------------------------------------------------------------------------
# Wrapper: packs weights (bf16 matmul operands) and invokes one pallas_call.
# ---------------------------------------------------------------------------
def mhsa_forward(text_indices, params, *, num_heads):
    B, L = text_indices.shape
    emb = params["embedding"]                                 # keep f32 (exact gather)
    V, H = emb.shape
    O = params["dense_w"].shape[1]

    # Merge per-layer Q/K/V weights into one (H, 3H) matrix (and (1, 3H) bias).
    wqkv = jnp.stack([jnp.concatenate([wq, wk, wv], axis=1)
                      for (wq, bq, wk, bk, wv, bv) in params["layers"]]
                     ).astype(jnp.bfloat16)                   # (NL, H, 3H)
    bqkv = jnp.stack([jnp.concatenate([bq, bk, bv], axis=1)
                      for (wq, bq, wk, bk, wv, bv) in params["layers"]])  # (NL, 1, 3H) f32
    wp = params["pool_w"].astype(jnp.bfloat16)
    wd = params["dense_w"].astype(jnp.bfloat16)
    idx2d = text_indices.reshape(B * L, 1).astype(jnp.int32)

    vmem = pl.BlockSpec(memory_space=pltpu.MemorySpace.VMEM)
    kernel = functools.partial(_mhsa_fused_kernel, num_heads=num_heads)
    return pl.pallas_call(
        kernel,
        out_shape=jax.ShapeDtypeStruct((B, O), jnp.float32),
        in_specs=[vmem] * 8,
        out_specs=vmem,
        scratch_shapes=[pltpu.VMEM((B * L, H), jnp.float32)],
    )(idx2d, emb, wqkv, bqkv,
      wp, params["pool_b"], wd, params["dense_b"])


# ---------------------------------------------------------------------------
# Parameter init (deterministic).
# ---------------------------------------------------------------------------
def init_params(key, *, vocab, hidden, num_layers, output_dim):
    keys = jax.random.split(key, 4 + 6 * num_layers)
    it = iter(keys)

    def lin(kin, shape, scale=0.05):
        return (scale * jax.random.normal(kin, shape)).astype(jnp.float32)

    params = {
        "embedding": lin(next(it), (vocab, hidden), 0.1),
        "layers": [],
        "pool_w": lin(next(it), (hidden, hidden)),
        "pool_b": jnp.zeros((1, hidden), jnp.float32),
        "dense_w": lin(next(it), (hidden, output_dim)),
        "dense_b": jnp.zeros((1, output_dim), jnp.float32),
    }
    _ = next(it)  # keep key count deterministic / round
    for _l in range(num_layers):
        wq = lin(next(it), (hidden, hidden))
        wk = lin(next(it), (hidden, hidden))
        wv = lin(next(it), (hidden, hidden))
        bq = lin(next(it), (1, hidden), 0.01)
        bk = lin(next(it), (1, hidden), 0.01)
        bv = lin(next(it), (1, hidden), 0.01)
        params["layers"].append((wq, bq, wk, bk, wv, bv))
    return params


if __name__ == "__main__":
    # Small config consistent with the module: hidden_dim=32, max_seq_len=8,
    # num_mhsa_layer=2, num_attention_heads=4, output_dim=3, vocab=50, batch=2.
    B, L, H, NH, NL, O, V = 2, 8, 32, 4, 2, 3, 50

    key = jax.random.PRNGKey(0)
    pkey, dkey = jax.random.split(key)
    params = init_params(pkey, vocab=V, hidden=H, num_layers=NL, output_dim=O)
    text_indices = jax.random.randint(dkey, (B, L), 0, V, dtype=jnp.int32)

    out = mhsa_forward(text_indices, params, num_heads=NH)
    jax.block_until_ready(out)
    assert out.shape == (B, O) and out.dtype == jnp.float32
    print("KERNEL_OK")
</pallas_src>

<mosaic_0001>
module attributes {stable_mosaic.version = 11 : i64} {
  func.func @_mhsa_fused_kernel(%arg0: memref<16x1xi32, #tpu.memory_space<vmem>>, %arg1: memref<50x32xf32, #tpu.memory_space<vmem>>, %arg2: memref<2x32x96xbf16, #tpu.memory_space<vmem>>, %arg3: memref<2x1x96xf32, #tpu.memory_space<vmem>>, %arg4: memref<32x32xbf16, #tpu.memory_space<vmem>>, %arg5: memref<1x32xf32, #tpu.memory_space<vmem>>, %arg6: memref<32x3xbf16, #tpu.memory_space<vmem>>, %arg7: memref<1x3xf32, #tpu.memory_space<vmem>>, %arg8: memref<2x3xf32, #tpu.memory_space<vmem>>, %arg9: memref<16x32xf32, #tpu.memory_space<vmem>>) attributes {dimension_semantics = [], scalar_prefetch = 0 : i64, scratch_operands = 1 : i64, tpu.core_type = #tpu.core_type<tc>} {
    %c0 = arith.constant 0 : index
    %c0_0 = arith.constant 0 : index
    %0 = vector.load %arg0[%c0, %c0_0] : memref<16x1xi32, #tpu.memory_space<vmem>>, vector<16x1xi32>
    %1 = tpu.iota {dimensions = array<i32: 1>} : vector<16x50xi32>
    %2 = vector.broadcast %0 : vector<16x1xi32> to vector<16x50xi32>
    %3 = arith.cmpi eq, %2, %1 : vector<16x50xi32>
    %4 = arith.extui %3 : vector<16x50xi1> to vector<16x50xi32>
    %5 = arith.sitofp %4 : vector<16x50xi32> to vector<16x50xf32>
    %c0_1 = arith.constant 0 : index
    %c0_2 = arith.constant 0 : index
    %6 = vector.load %arg1[%c0_1, %c0_2] : memref<50x32xf32, #tpu.memory_space<vmem>>, vector<50x32xf32>
    %cst = arith.constant dense<0.000000e+00> : vector<16x32xf32>
    %7 = tpu.matmul %5, %6, %cst {dimension_numbers = #tpu.dot_dimension_numbers<[1], [0], [0], [1], [0, 0, 1, 1], [], []>} : vector<16x50xf32>, vector<50x32xf32>, vector<16x32xf32> -> vector<16x32xf32>
    %c0_3 = arith.constant 0 : index
    %c0_4 = arith.constant 0 : index
    %8 = vector.load %arg9[%c0_3, %c0_4] : memref<16x32xf32, #tpu.memory_space<vmem>>, vector<16x32xf32>
    tpu.vector_store %arg9[%c0_3, %c0_4], %7 {strides = array<i32>} : memref<16x32xf32, #tpu.memory_space<vmem>>, vector<16x32xf32>,
    %c0_i32 = arith.constant 0 : i32
    %c2_i32 = arith.constant 2 : i32
    %9 = arith.addi %c0_i32, %c2_i32 : i32
    %c1_i32 = arith.constant 1 : i32
    scf.for %arg10 = %c0_i32 to %9 step %c1_i32  : i32 {
      %c0_20 = arith.constant 0 : index
      %c0_21 = arith.constant 0 : index
      %25 = vector.load %arg9[%c0_20, %c0_21] : memref<16x32xf32, #tpu.memory_space<vmem>>, vector<16x32xf32>
      %26 = arith.index_cast %arg10 : i32 to index
      %c0_22 = arith.constant 0 : index
      %c0_23 = arith.constant 0 : index
      %27 = vector.load %arg2[%26, %c0_22, %c0_23] : memref<2x32x96xbf16, #tpu.memory_space<vmem>>, vector<1x32x96xbf16>
      %28 = vector.shape_cast %27 : vector<1x32x96xbf16> to vector<32x96xbf16>
      %29 = arith.index_cast %arg10 : i32 to index
      %c0_24 = arith.constant 0 : index
      %c0_25 = arith.constant 0 : index
      %30 = vector.load %arg3[%29, %c0_24, %c0_25] : memref<2x1x96xf32, #tpu.memory_space<vmem>>, vector<1x1x96xf32>
      %31 = vector.shape_cast %30 : vector<1x1x96xf32> to vector<1x96xf32>
      %32 = arith.truncf %25 : vector<16x32xf32> to vector<16x32xbf16>
      %cst_26 = arith.constant dense<0.000000e+00> : vector<16x96xf32>
      %33 = tpu.matmul %32, %28, %cst_26 {dimension_numbers = #tpu.dot_dimension_numbers<[1], [0], [0], [1], [0, 0, 1, 1], [], []>} : vector<16x32xbf16>, vector<32x96xbf16>, vector<16x96xf32> -> vector<16x96xf32>
      %34 = vector.broadcast %31 : vector<1x96xf32> to vector<16x96xf32>
      %35 = arith.addf %33, %34 : vector<16x96xf32>
      %36 = vector.shape_cast %35 : vector<16x96xf32> to vector<2x8x96xf32>
      %37 = vector.extract_strided_slice %36 {offsets = [0, 0, 0], sizes = [2, 8, 8], strides = [1, 1, 1]} : vector<2x8x96xf32> to vector<2x8x8xf32>
      %38 = arith.truncf %37 : vector<2x8x8xf32> to vector<2x8x8xbf16>
      %39 = vector.extract_strided_slice %36 {offsets = [0, 0, 32], sizes = [2, 8, 8], strides = [1, 1, 1]} : vector<2x8x96xf32> to vector<2x8x8xf32>
      %40 = arith.truncf %39 : vector<2x8x8xf32> to vector<2x8x8xbf16>
      %41 = vector.extract_strided_slice %36 {offsets = [0, 0, 64], sizes = [2, 8, 8], strides = [1, 1, 1]} : vector<2x8x96xf32> to vector<2x8x8xf32>
      %42 = arith.truncf %41 : vector<2x8x8xf32> to vector<2x8x8xbf16>
      %cst_27 = arith.constant dense<0.000000e+00> : vector<2x8x8xf32>
      %43 = tpu.matmul %38, %40, %cst_27 {dimension_numbers = #tpu.dot_dimension_numbers<[2], [2], [1], [1], [0, 0, 0, 1, 1, 1], [0], [0]>} : vector<2x8x8xbf16>, vector<2x8x8xbf16>, vector<2x8x8xf32> -> vector<2x8x8xf32>
      %cst_28 = arith.constant 0.353553385 : f32
      %44 = vector.broadcast %cst_28 : f32 to vector<2x8x8xf32>
      %45 = arith.mulf %43, %44 : vector<2x8x8xf32>
      %cst_29 = arith.constant dense<0xFF800000> : vector<2x8xf32>
      %46 = vector.multi_reduction <maximumf>, %45, %cst_29 [2] : vector<2x8x8xf32> to vector<2x8xf32>
      %47 = vector.shape_cast %46 : vector<2x8xf32> to vector<2x8x1xf32>
      %48 = vector.broadcast %47 : vector<2x8x1xf32> to vector<2x8x8xf32>
      %49 = arith.subf %45, %48 : vector<2x8x8xf32>
      %50 = math.exp %49 : vector<2x8x8xf32>
      %cst_30 = arith.constant dense<0.000000e+00> : vector<2x8xf32>
      %51 = vector.multi_reduction <add>, %50, %cst_30 [2] : vector<2x8x8xf32> to vector<2x8xf32>
      %52 = vector.shape_cast %51 : vector<2x8xf32> to vector<2x8x1xf32>
      %53 = tpu.reciprocal %52 {approx = true} : vector<2x8x1xf32> -> vector<2x8x1xf32>
      %54 = vector.broadcast %53 : vector<2x8x1xf32> to vector<2x8x8xf32>
      %55 = arith.mulf %50, %54 : vector<2x8x8xf32>
      %56 = arith.truncf %55 : vector<2x8x8xf32> to vector<2x8x8xbf16>
      %cst_31 = arith.constant dense<0.000000e+00> : vector<2x8x8xf32>
      %57 = tpu.matmul %56, %42, %cst_31 {dimension_numbers = #tpu.dot_dimension_numbers<[2], [1], [1], [2], [0, 0, 0, 1, 1, 2], [0], [0]>} : vector<2x8x8xbf16>, vector<2x8x8xbf16>, vector<2x8x8xf32> -> vector<2x8x8xf32>
      %58 = vector.extract_strided_slice %36 {offsets = [0, 0, 8], sizes = [2, 8, 8], strides = [1, 1, 1]} : vector<2x8x96xf32> to vector<2x8x8xf32>
      %59 = arith.truncf %58 : vector<2x8x8xf32> to vector<2x8x8xbf16>
      %60 = vector.extract_strided_slice %36 {offsets = [0, 0, 40], sizes = [2, 8, 8], strides = [1, 1, 1]} : vector<2x8x96xf32> to vector<2x8x8xf32>
      %61 = arith.truncf %60 : vector<2x8x8xf32> to vector<2x8x8xbf16>
      %62 = vector.extract_strided_slice %36 {offsets = [0, 0, 72], sizes = [2, 8, 8], strides = [1, 1, 1]} : vector<2x8x96xf32> to vector<2x8x8xf32>
      %63 = arith.truncf %62 : vector<2x8x8xf32> to vector<2x8x8xbf16>
      %cst_32 = arith.constant dense<0.000000e+00> : vector<2x8x8xf32>
      %64 = tpu.matmul %59, %61, %cst_32 {dimension_numbers = #tpu.dot_dimension_numbers<[2], [2], [1], [1], [0, 0, 0, 1, 1, 1], [0], [0]>} : vector<2x8x8xbf16>, vector<2x8x8xbf16>, vector<2x8x8xf32> -> vector<2x8x8xf32>
      %cst_33 = arith.constant 0.353553385 : f32
      %65 = vector.broadcast %cst_33 : f32 to vector<2x8x8xf32>
      %66 = arith.mulf %64, %65 : vector<2x8x8xf32>
      %cst_34 = arith.constant dense<0xFF800000> : vector<2x8xf32>
      %67 = vector.multi_reduction <maximumf>, %66, %cst_34 [2] : vector<2x8x8xf32> to vector<2x8xf32>
      %68 = vector.shape_cast %67 : vector<2x8xf32> to vector<2x8x1xf32>
      %69 = vector.broadcast %68 : vector<2x8x1xf32> to vector<2x8x8xf32>
      %70 = arith.subf %66, %69 : vector<2x8x8xf32>
      %71 = math.exp %70 : vector<2x8x8xf32>
      %cst_35 = arith.constant dense<0.000000e+00> : vector<2x8xf32>
      %72 = vector.multi_reduction <add>, %71, %cst_35 [2] : vector<2x8x8xf32> to vector<2x8xf32>
      %73 = vector.shape_cast %72 : vector<2x8xf32> to vector<2x8x1xf32>
      %74 = tpu.reciprocal %73 {approx = true} : vector<2x8x1xf32> -> vector<2x8x1xf32>
      %75 = vector.broadcast %74 : vector<2x8x1xf32> to vector<2x8x8xf32>
      %76 = arith.mulf %71, %75 : vector<2x8x8xf32>
      %77 = arith.truncf %76 : vector<2x8x8xf32> to vector<2x8x8xbf16>
      %cst_36 = arith.constant dense<0.000000e+00> : vector<2x8x8xf32>
      %78 = tpu.matmul %77, %63, %cst_36 {dimension_numbers = #tpu.dot_dimension_numbers<[2], [1], [1], [2], [0, 0, 0, 1, 1, 2], [0], [0]>} : vector<2x8x8xbf16>, vector<2x8x8xbf16>, vector<2x8x8xf32> -> vector<2x8x8xf32>
      %79 = vector.extract_strided_slice %36 {offsets = [0, 0, 16], sizes = [2, 8, 8], strides = [1, 1, 1]} : vector<2x8x96xf32> to vector<2x8x8xf32>
      %80 = arith.truncf %79 : vector<2x8x8xf32> to vector<2x8x8xbf16>
      %81 = vector.extract_strided_slice %36 {offsets = [0, 0, 48], sizes = [2, 8, 8], strides = [1, 1, 1]} : vector<2x8x96xf32> to vector<2x8x8xf32>
      %82 = arith.truncf %81 : vector<2x8x8xf32> to vector<2x8x8xbf16>
      %83 = vector.extract_strided_slice %36 {offsets = [0, 0, 80], sizes = [2, 8, 8], strides = [1, 1, 1]} : vector<2x8x96xf32> to vector<2x8x8xf32>
      %84 = arith.truncf %83 : vector<2x8x8xf32> to vector<2x8x8xbf16>
      %cst_37 = arith.constant dense<0.000000e+00> : vector<2x8x8xf32>
      %85 = tpu.matmul %80, %82, %cst_37 {dimension_numbers = #tpu.dot_dimension_numbers<[2], [2], [1], [1], [0, 0, 0, 1, 1, 1], [0], [0]>} : vector<2x8x8xbf16>, vector<2x8x8xbf16>, vector<2x8x8xf32> -> vector<2x8x8xf32>
      %cst_38 = arith.constant 0.353553385 : f32
      %86 = vector.broadcast %cst_38 : f32 to vector<2x8x8xf32>
      %87 = arith.mulf %85, %86 : vector<2x8x8xf32>
      %cst_39 = arith.constant dense<0xFF800000> : vector<2x8xf32>
      %88 = vector.multi_reduction <maximumf>, %87, %cst_39 [2] : vector<2x8x8xf32> to vector<2x8xf32>
      %89 = vector.shape_cast %88 : vector<2x8xf32> to vector<2x8x1xf32>
      %90 = vector.broadcast %89 : vector<2x8x1xf32> to vector<2x8x8xf32>
      %91 = arith.subf %87, %90 : vector<2x8x8xf32>
      %92 = math.exp %91 : vector<2x8x8xf32>
      %cst_40 = arith.constant dense<0.000000e+00> : vector<2x8xf32>
      %93 = vector.multi_reduction <add>, %92, %cst_40 [2] : vector<2x8x8xf32> to vector<2x8xf32>
      %94 = vector.shape_cast %93 : vector<2x8xf32> to vector<2x8x1xf32>
      %95 = tpu.reciprocal %94 {approx = true} : vector<2x8x1xf32> -> vector<2x8x1xf32>
      %96 = vector.broadcast %95 : vector<2x8x1xf32> to vector<2x8x8xf32>
      %97 = arith.mulf %92, %96 : vector<2x8x8xf32>
      %98 = arith.truncf %97 : vector<2x8x8xf32> to vector<2x8x8xbf16>
      %cst_41 = arith.constant dense<0.000000e+00> : vector<2x8x8xf32>
      %99 = tpu.matmul %98, %84, %cst_41 {dimension_numbers = #tpu.dot_dimension_numbers<[2], [1], [1], [2], [0, 0, 0, 1, 1, 2], [0], [0]>} : vector<2x8x8xbf16>, vector<2x8x8xbf16>, vector<2x8x8xf32> -> vector<2x8x8xf32>
      %100 = vector.extract_strided_slice %36 {offsets = [0, 0, 24], sizes = [2, 8, 8], strides = [1, 1, 1]} : vector<2x8x96xf32> to vector<2x8x8xf32>
      %101 = arith.truncf %100 : vector<2x8x8xf32> to vector<2x8x8xbf16>
      %102 = vector.extract_strided_slice %36 {offsets = [0, 0, 56], sizes = [2, 8, 8], strides = [1, 1, 1]} : vector<2x8x96xf32> to vector<2x8x8xf32>
      %103 = arith.truncf %102 : vector<2x8x8xf32> to vector<2x8x8xbf16>
      %104 = vector.extract_strided_slice %36 {offsets = [0, 0, 88], sizes = [2, 8, 8], strides = [1, 1, 1]} : vector<2x8x96xf32> to vector<2x8x8xf32>
      %105 = arith.truncf %104 : vector<2x8x8xf32> to vector<2x8x8xbf16>
      %cst_42 = arith.constant dense<0.000000e+00> : vector<2x8x8xf32>
      %106 = tpu.matmul %101, %103, %cst_42 {dimension_numbers = #tpu.dot_dimension_numbers<[2], [2], [1], [1], [0, 0, 0, 1, 1, 1], [0], [0]>} : vector<2x8x8xbf16>, vector<2x8x8xbf16>, vector<2x8x8xf32> -> vector<2x8x8xf32>
      %cst_43 = arith.constant 0.353553385 : f32
      %107 = vector.broadcast %cst_43 : f32 to vector<2x8x8xf32>
      %108 = arith.mulf %106, %107 : vector<2x8x8xf32>
      %cst_44 = arith.constant dense<0xFF800000> : vector<2x8xf32>
      %109 = vector.multi_reduction <maximumf>, %108, %cst_44 [2] : vector<2x8x8xf32> to vector<2x8xf32>
      %110 = vector.shape_cast %109 : vector<2x8xf32> to vector<2x8x1xf32>
      %111 = vector.broadcast %110 : vector<2x8x1xf32> to vector<2x8x8xf32>
      %112 = arith.subf %108, %111 : vector<2x8x8xf32>
      %113 = math.exp %112 : vector<2x8x8xf32>
      %cst_45 = arith.constant dense<0.000000e+00> : vector<2x8xf32>
      %114 = vector.multi_reduction <add>, %113, %cst_45 [2] : vector<2x8x8xf32> to vector<2x8xf32>
      %115 = vector.shape_cast %114 : vector<2x8xf32> to vector<2x8x1xf32>
      %116 = tpu.reciprocal %115 {approx = true} : vector<2x8x1xf32> -> vector<2x8x1xf32>
      %117 = vector.broadcast %116 : vector<2x8x1xf32> to vector<2x8x8xf32>
      %118 = arith.mulf %113, %117 : vector<2x8x8xf32>
      %119 = arith.truncf %118 : vector<2x8x8xf32> to vector<2x8x8xbf16>
      %cst_46 = arith.constant dense<0.000000e+00> : vector<2x8x8xf32>
      %120 = tpu.matmul %119, %105, %cst_46 {dimension_numbers = #tpu.dot_dimension_numbers<[2], [1], [1], [2], [0, 0, 0, 1, 1, 2], [0], [0]>} : vector<2x8x8xbf16>, vector<2x8x8xbf16>, vector<2x8x8xf32> -> vector<2x8x8xf32>
      %121 = tpu.concatenate %57, %78, %99, %120 in 2 : vector<2x8x8xf32>, vector<2x8x8xf32>, vector<2x8x8xf32>, vector<2x8x8xf32> -> vector<2x8x32xf32>
      %122 = math.tanh %121 : vector<2x8x32xf32>
      %123 = vector.shape_cast %122 : vector<2x8x32xf32> to vector<16x32xf32>
      %c0_47 = arith.constant 0 : index
      %c0_48 = arith.constant 0 : index
      %124 = vector.load %arg9[%c0_47, %c0_48] : memref<16x32xf32, #tpu.memory_space<vmem>>, vector<16x32xf32>
      tpu.vector_store %arg9[%c0_47, %c0_48], %123 {strides = array<i32>} : memref<16x32xf32, #tpu.memory_space<vmem>>, vector<16x32xf32>,
    }
    %c2_i32_5 = arith.constant 2 : i32
    %c0_6 = arith.constant 0 : index
    %c0_7 = arith.constant 0 : index
    %10 = tpu.strided_load %arg9[%c0_6, %c0_7] {strides = array<i32: 8, 1>} : memref<16x32xf32, #tpu.memory_space<vmem>>, vector<2x32xf32>
    %11 = arith.truncf %10 : vector<2x32xf32> to vector<2x32xbf16>
    %c0_8 = arith.constant 0 : index
    %c0_9 = arith.constant 0 : index
    %12 = vector.load %arg4[%c0_8, %c0_9] : memref<32x32xbf16, #tpu.memory_space<vmem>>, vector<32x32xbf16>
    %cst_10 = arith.constant dense<0.000000e+00> : vector<2x32xf32>
    %13 = tpu.matmul %11, %12, %cst_10 {dimension_numbers = #tpu.dot_dimension_numbers<[1], [0], [0], [1], [0, 0, 1, 1], [], []>} : vector<2x32xbf16>, vector<32x32xbf16>, vector<2x32xf32> -> vector<2x32xf32>
    %c0_11 = arith.constant 0 : index
    %c0_12 = arith.constant 0 : index
    %14 = vector.load %arg5[%c0_11, %c0_12] : memref<1x32xf32, #tpu.memory_space<vmem>>, vector<1x32xf32>
    %15 = vector.broadcast %14 : vector<1x32xf32> to vector<2x32xf32>
    %16 = arith.addf %13, %15 : vector<2x32xf32>
    %17 = math.tanh %16 : vector<2x32xf32>
    %18 = arith.truncf %17 : vector<2x32xf32> to vector<2x32xbf16>
    %c0_13 = arith.constant 0 : index
    %c0_14 = arith.constant 0 : index
    %19 = vector.load %arg6[%c0_13, %c0_14] : memref<32x3xbf16, #tpu.memory_space<vmem>>, vector<32x3xbf16>
    %cst_15 = arith.constant dense<0.000000e+00> : vector<2x3xf32>
    %20 = tpu.matmul %18, %19, %cst_15 {dimension_numbers = #tpu.dot_dimension_numbers<[1], [0], [0], [1], [0, 0, 1, 1], [], []>} : vector<2x32xbf16>, vector<32x3xbf16>, vector<2x3xf32> -> vector<2x3xf32>
    %c0_16 = arith.constant 0 : index
    %c0_17 = arith.constant 0 : index
    %21 = vector.load %arg7[%c0_16, %c0_17] : memref<1x3xf32, #tpu.memory_space<vmem>>, vector<1x3xf32>
    %22 = vector.broadcast %21 : vector<1x3xf32> to vector<2x3xf32>
    %23 = arith.addf %20, %22 : vector<2x3xf32>
    %c0_18 = arith.constant 0 : index
    %c0_19 = arith.constant 0 : index
    %24 = vector.load %arg8[%c0_18, %c0_19] : memref<2x3xf32, #tpu.memory_space<vmem>>, vector<2x3xf32>
    tpu.vector_store %arg8[%c0_18, %c0_19], %23 {strides = array<i32>} : memref<2x3xf32, #tpu.memory_space<vmem>>, vector<2x3xf32>,
    return
  }
}

</mosaic_0001>

<llo_original>
// kernel: tpu_custom_call.1
$region0: #{tpu_custom_call.1}
  #allocation0 [shape = 'u32[]', space=smem, size = 0x4, offset = 0x4, fixed_abs, tag = 'smem constant byte address 0x4 - core index']
  #allocation1 [shape = 'u32[144,128]{1,0:T(1,128)}', space=vmem, size = 0x12000, scoped, tag = 'internal scratch']
  #allocation2 [shape = 'f32[16,32]{1,0:T(8,128)}', space=vmem, size = 0x2000, scoped, tag = 'scratch operand']
  %s0 = inlined_call_operand.vmem [shape: s32[16,1], index: 0, kind: input, shape index: {}]
  %s1 = inlined_call_operand.vmem [shape: f32[50,32], index: 1, kind: input, shape index: {}]
  %s2 = inlined_call_operand.vmem [shape: bf16[2,32,96], index: 2, kind: input, shape index: {}]
  %s3 = inlined_call_operand.vmem [shape: f32[2,1,96], index: 3, kind: input, shape index: {}]
  %s4 = inlined_call_operand.vmem [shape: bf16[32,32], index: 4, kind: input, shape index: {}]
  %s5 = inlined_call_operand.vmem [shape: f32[1,32], index: 5, kind: input, shape index: {}]
  %s6 = inlined_call_operand.vmem [shape: bf16[32,3], index: 6, kind: input, shape index: {}]
  %s7 = inlined_call_operand.vmem [shape: f32[1,3], index: 7, kind: input, shape index: {}]
  %s8 = inlined_call_operand.hbm [shape: f32[2,3], index: 8, kind: output, shape index: {}]
  %s9 = sld [smem:[#allocation0]]
  $region49: #{tpu_custom_call.1} parent=0
    _
  %s11 = ssub.s32 1, %s9
  %s12 = scalar_select 0, %s11, %s9
  $region1: #{tpu_custom_call.1} parent=0
    #allocation3 [shape = 'u8[1024]{0}', space=vmem, size = 0x400, scoped, tag = 'output window, operand 0, single buffered']
    #allocation4 [shape = 's32[1]{0}', space=sflag, size = 0x4, scoped, tag = 'scoped memory for tpu_custom_call.1']
    %13 = vsyncpa [#allocation4], 0
    // Predicated region
    $region2: #{tpu_custom_call.1} parent=1 // pred_check
      _
    $region3: #{tpu_custom_call.1} parent=1 // pred_check_branch
      %15 = sbr.rel (0) target = $region5
    $region4: #{tpu_custom_call.1} parent=1 // pred_region
      _
    $region5: #{tpu_custom_call.1} parent=1 // pred_fallthru
      _
    // Predicated region
    $region6: #{tpu_custom_call.1} parent=1 // pred_check
      _
    $region7: #{tpu_custom_call.1} parent=1 // pred_check_branch
      %17 = sbr.rel (0) target = $region9
    $region8: #{tpu_custom_call.1} parent=1 // pred_region
      _
    $region9: #{tpu_custom_call.1} parent=1 // pred_fallthru
      _
    // Predicated region
    $region10: #{tpu_custom_call.1} parent=1 // pred_check
      _
    $region11: #{tpu_custom_call.1} parent=1 // pred_check_branch
      %19 = sbr.rel (0) target = $region13
    $region12: #{tpu_custom_call.1} parent=1 // pred_region
      _
    $region13: #{tpu_custom_call.1} parent=1 // pred_fallthru
      _
    // Predicated region
    $region14: #{tpu_custom_call.1} parent=1 // pred_check
      _
    $region15: #{tpu_custom_call.1} parent=1 // pred_check_branch
      %21 = sbr.rel (0) target = $region17
    $region16: #{tpu_custom_call.1} parent=1 // pred_region
      _
    $region17: #{tpu_custom_call.1} parent=1 // pred_fallthru
      _
    // Predicated region
    $region18: #{tpu_custom_call.1} parent=1 // pred_check
      _
    $region19: #{tpu_custom_call.1} parent=1 // pred_check_branch
      %23 = sbr.rel (0) target = $region21
    $region20: #{tpu_custom_call.1} parent=1 // pred_region
      _
    $region21: #{tpu_custom_call.1} parent=1 // pred_fallthru
      _
    // Predicated region
    $region22: #{tpu_custom_call.1} parent=1 // pred_check
      _
    $region23: #{tpu_custom_call.1} parent=1 // pred_check_branch
      %25 = sbr.rel (0) target = $region25
    $region24: #{tpu_custom_call.1} parent=1 // pred_region
      _
    $region25: #{tpu_custom_call.1} parent=1 // pred_fallthru
      _
    // Predicated region
    $region26: #{tpu_custom_call.1} parent=1 // pred_check
      _
    $region27: #{tpu_custom_call.1} parent=1 // pred_check_branch
      %27 = sbr.rel (0) target = $region29
    $region28: #{tpu_custom_call.1} parent=1 // pred_region
      _
    $region29: #{tpu_custom_call.1} parent=1 // pred_fallthru
      _
    // Predicated region
    $region30: #{tpu_custom_call.1} parent=1 // pred_check
      _
    $region31: #{tpu_custom_call.1} parent=1 // pred_check_branch
      %29 = sbr.rel (0) target = $region33
    $region32: #{tpu_custom_call.1} parent=1 // pred_region
      _
    $region33: #{tpu_custom_call.1} parent=1 // pred_fallthru
      _
    %v31 = vld [vmem:[%s0] sm:$0xff]
    %v32 = vld [vmem:[%s0 + $0x8] sm:$0xff]
    %v33 = vlaneseq
    %v34 = vand.u32 %v33, 127
    %35 = vset.pattern.permute.xlu0 0
    %36 = vperm.xlu0 %35, %v31
    %v37 = vpop.permute.xlu0 %36
    %38 = vset.pattern.permute.xlu0 0
    %39 = vperm.xlu0 %38, %v32
    %v40 = vpop.permute.xlu0 %39
    %vm41 = vcmp.eq.s32.totalorder %v37, %v34
    %vm42 = vcmp.eq.s32.totalorder %v40, %v34
    %v43 = vsel %vm41, 1, 0
    %v44 = vsel %vm42, 1, 0
    %v45 = vcvt.s32.f32 %v43
    %v46 = vcvt.s32.f32 %v44
    %v47 = vld [vmem:[%s1] sm:$0xff]
    %v48 = vld [vmem:[%s1 + $0x8] sm:$0xff]
    %v49 = vld [vmem:[%s1 + $0x10] sm:$0xff]
    %v50 = vld [vmem:[%s1 + $0x18] sm:$0xff]
    %v51 = vld [vmem:[%s1 + $0x20] sm:$0xff]
    %v52 = vld [vmem:[%s1 + $0x28] sm:$0xff]
    %v53 = vld [vmem:[%s1 + $0x30] sm:$0x3]
    %vm54 = vcmask 408576
    %v56 = vsel %vm54, %v45, 0
    %v59 = vsel %vm54, %v46, 0
    %vm61 = vcmask 1041408
    %v63 = vsel %vm61, %v53, 0
    %65 = vmatprep.subr.mxu0 0.0
    %66 = vmatpush1.msra.mxu0 %v47
    %67 = vmatprep.subr.mxu0 0.0
    %68 = vmatpush1.msra.mxu0 %v48
    %69 = vmatprep.subr.mxu0 0.0
    %70 = vmatpush1.msra.mxu0 %v49
    %71 = vmatprep.subr.mxu0 0.0
    %72 = vmatpush1.msra.mxu0 %v50
    %73 = vmatprep.subr.mxu0 0.0
    %74 = vmatpush1.msra.mxu0 %v51
    %75 = vmatprep.subr.mxu0 0.0
    %76 = vmatpush1.msra.mxu0 %v52
    %77 = vmatprep.subr.mxu0 0.0
    %78 = vmatpush1.msra.mxu0 %v63
    %79 = vmatprep.subr.mxu0 0.0
    %80 = vmatpush1.msra.mxu0 0.0
    %81 = vmatprep.subr.mxu0 0.0
    %82 = vmatpush1.msra.mxu0 0.0
    %83 = vmatprep.subr.mxu0 0.0
    %84 = vmatpush1.msra.mxu0 0.0
    %85 = vmatprep.subr.mxu0 0.0
    %86 = vmatpush1.msra.mxu0 0.0
    %87 = vmatprep.subr.mxu0 0.0
    %88 = vmatpush1.msra.mxu0 0.0
    %89 = vmatprep.subr.mxu0 0.0
    %90 = vmatpush1.msra.mxu0 0.0
    %91 = vmatprep.subr.mxu0 0.0
    %92 = vmatpush1.msra.mxu0 0.0
    %93 = vmatprep.subr.mxu0 0.0
    %94 = vmatpush1.msra.mxu0 0.0
    %95 = vmatprep.subr.mxu0 0.0
    %96 = vmatpush1.msra.mxu0 0.0
    %97 = vmatprep.subr.mxu0 0.0
    %98 = vmatpush1.msra.mxu0 0.0
    %99 = vmatprep.subr.mxu0 0.0
    %100 = vmatpush1.msra.mxu0 0.0
    %101 = vmatprep.subr.mxu0 0.0
    %102 = vmatpush1.msra.mxu0 0.0
    %103 = vmatprep.subr.mxu0 0.0
    %104 = vmatpush1.msra.mxu0 0.0
    %105 = vmatprep.subr.mxu0 0.0
    %106 = vmatpush1.msra.mxu0 0.0
    %107 = vmatprep.subr.mxu0 0.0
    %108 = vmatpush1.msra.mxu0 0.0
    %109 = vmatprep.subr.mxu0 0.0
    %110 = vmatpush1.msra.mxu0 0.0
    %111 = vmatprep.subr.mxu0 0.0
    %112 = vmatpush1.msra.mxu0 0.0
    %113 = vmatprep.subr.mxu0 0.0
    %114 = vmatpush1.msra.mxu0 0.0
    %115 = vmatprep.subr.mxu0 0.0
    %116 = vmatpush1.msra.mxu0 0.0
    %117 = vmatprep.subr.mxu0 0.0
    %118 = vmatpush1.msra.mxu0 0.0
    %119 = vmatprep.subr.mxu0 0.0
    %120 = vmatpush1.msra.mxu0 0.0
    %121 = vmatprep.subr.mxu0 0.0
    %122 = vmatpush1.msra.mxu0 0.0
    %123 = vmatprep.subr.mxu0 0.0
    %124 = vmatpush1.msra.mxu0 0.0
    %125 = vmatprep.subr.mxu0 0.0
    %126 = vmatpush1.msra.mxu0 0.0
    %127 = vmatprep.subr.mxu0 0.0
    %128 = vmatpush1.msra.mxu0 0.0
    %129 = vmatprep.mubr.f32.mxu0 0.0
    %130 = vmatmul.mubr.f32.gmra.mrb[0].mxu0 %v56
    %v131 = vpop.f32.mrb[0].mxu0
    %v132 = vadd.f32 0.0, %v131
    %v133 = vpop.f32.mrb[0].mxu0
    %134 = vmatprep.mubr.f32.mxu0 0.0
    %135 = vmatmul.mubr.f32.gmra.mrb[0].mxu0 %v59
    %v136 = vpop.f32.mrb[0].mxu0
    %v137 = vadd.f32 0.0, %v136
    %v138 = vpop.f32.mrb[0].mxu0
    %139 = vdwg.mxu0
    %vm140 = vcmask 261120
    %141 = vst.msk [vmem:[#allocation2] sm:$0xff] %vm140, %v132
    %142 = vst.msk [vmem:[#allocation2 + $0x8] sm:$0xff] %vm140, %v137
    loop: start=0, step=1, limit=2
    $region34: #{tpu_custom_call.1} parent=1 // loop_pre_header
      _
    $region35: #{tpu_custom_call.1} parent=1 // loop_header
      %s144 = sphi 0, %s148
      %p145 = scmp.ge.s32.totalorder %s144, 2
    $region36: #{tpu_custom_call.1} parent=1 // loop_header_branch
      %147 = sbr.rel (%p145) target = $region40
    $region37: #{tpu_custom_call.1} parent=1 // loop_body
      %v149 = vld [vmem:[#allocation2] sm:$0xff]
      %v150 = vld [vmem:[#allocation2 + $0x8] sm:$0xff]
      %s151 = smul.u32 %s144, 4
      %s152 = smul.addr %s151, 4
      %s153 = scalar_lea.vmem %s2, %s152
      %v154 = vld [vmem:[%s153] sm:$0xf]
      %v155 = vld [vmem:[%s153 + $0x4] sm:$0xf]
      %v156 = vld [vmem:[%s153 + $0x8] sm:$0xf]
      %v157 = vld [vmem:[%s153 + $0xc] sm:$0xf]
      %s158 = scalar_lea.vmem %s3, %s144
      %v159 = vld [vmem:[%s158] sm:$0x1]
      %v160 = vpack.c.bf16 %v150, %v149
      %v162 = vlaneseq
      %v163 = vshrl.u32 %v162, 7
      %v164 = vsub.s32 0, %v163
      %v165 = vrot.slane %v159, %v164
      %v171 = vunpack.c.l.b16 %v154
      %v172 = vunpack.c.l.b16 %v155
      %v173 = vunpack.c.l.b16 %v156
      %v174 = vunpack.c.l.b16 %v157
      %v175 = vpack.c.b16 %v172, %v171
      %v176 = vpack.c.b16 %v174, %v173
      %v180 = vsel %vm140, %v160, 0
      %182 = vmatprep.subr.bf16.mxu0 0
      %183 = vmatpush1.bf16.msra.mxu0 %v175
      %184 = vmatprep.subr.bf16.mxu0 0
      %185 = vmatpush1.bf16.msra.mxu0 %v176
      %186 = vmatprep.subr.bf16.mxu0 0
      %187 = vmatpush1.bf16.msra.mxu0 0
      %188 = vmatprep.subr.bf16.mxu0 0
      %189 = vmatpush1.bf16.msra.mxu0 0
      %190 = vmatprep.subr.bf16.mxu0 0
      %191 = vmatpush1.bf16.msra.mxu0 0
      %192 = vmatprep.subr.bf16.mxu0 0
      %193 = vmatpush1.bf16.msra.mxu0 0
      %194 = vmatprep.subr.bf16.mxu0 0
      %195 = vmatpush1.bf16.msra.mxu0 0
      %196 = vmatprep.subr.bf16.mxu0 0
      %197 = vmatpush1.bf16.msra.mxu0 0
      %198 = vmatprep.subr.bf16.mxu0 0
      %199 = vmatpush1.bf16.msra.mxu0 0
      %200 = vmatprep.subr.bf16.mxu0 0
      %201 = vmatpush1.bf16.msra.mxu0 0
      %202 = vmatprep.subr.bf16.mxu0 0
      %203 = vmatpush1.bf16.msra.mxu0 0
      %204 = vmatprep.subr.bf16.mxu0 0
      %205 = vmatpush1.bf16.msra.mxu0 0
      %206 = vmatprep.subr.bf16.mxu0 0
      %207 = vmatpush1.bf16.msra.mxu0 0
      %208 = vmatprep.subr.bf16.mxu0 0
      %209 = vmatpush1.bf16.msra.mxu0 0
      %210 = vmatprep.subr.bf16.mxu0 0
      %211 = vmatpush1.bf16.msra.mxu0 0
      %212 = vmatprep.subr.bf16.mxu0 0
      %213 = vmatpush1.bf16.msra.mxu0 0
      %214 = vmatprep.mubr.bf16.mxu0 0
      %215 = vmatmul.mubr.bf16.gmra.mrb[0].mxu0 %v180
      %v216 = vpop.f32.mrb[0].mxu0
      %v217 = vadd.f32 %v165, %v216
      %v218 = vpop.f32.mrb[0].mxu0
      %v219 = vpop.f32.mrb[0].mxu0
      %v220 = vadd.f32 %v165, %v219
      %v221 = vpop.f32.mrb[0].mxu0
      %222 = vdwg.mxu0
      %v223 = vpack.c.bf16 %v217, %v217
      %v224 = vpack.c.bf16 %v220, %v220
      %226 = vrot.lane.b32.xlu0 %v223, 96
      %v227 = vpop.permute.xlu0 %226
      %vm228 = vcmask 64512
      %v230 = vsel %vm228, %v223, 0
      %v233 = vsel %vm228, %v227, 0
      %235 = vmatprep.subr.bf16.mxu0 0
      %236 = vmatpush1.bf16.xpose.msra.mxu0 %v233
      %237 = vmatprep.subr.bf16.mxu0 0
      %238 = vmatpush1.bf16.xpose.msra.mxu0 0
      %239 = vmatprep.subr.bf16.mxu0 0
      %240 = vmatpush1.bf16.xpose.msra.mxu0 0
      %241 = vmatprep.subr.bf16.mxu0 0
      %242 = vmatpush1.bf16.xpose.msra.mxu0 0
      %243 = vmatprep.subr.bf16.mxu0 0
      %244 = vmatpush1.bf16.xpose.msra.mxu0 0
      %245 = vmatprep.subr.bf16.mxu0 0
      %246 = vmatpush1.bf16.xpose.msra.mxu0 0
      %247 = vmatprep.subr.bf16.mxu0 0
      %248 = vmatpush1.bf16.xpose.msra.mxu0 0
      %249 = vmatprep.subr.bf16.mxu0 0
      %250 = vmatpush1.bf16.xpose.msra.mxu0 0
      %251 = vmatprep.subr.bf16.mxu0 0
      %252 = vmatpush1.bf16.xpose.msra.mxu0 0
      %253 = vmatprep.subr.bf16.mxu0 0
      %254 = vmatpush1.bf16.xpose.msra.mxu0 0
      %255 = vmatprep.subr.bf16.mxu0 0
      %256 = vmatpush1.bf16.xpose.msra.mxu0 0
      %257 = vmatprep.subr.bf16.mxu0 0
      %258 = vmatpush1.bf16.xpose.msra.mxu0 0
      %259 = vmatprep.subr.bf16.mxu0 0
      %260 = vmatpush1.bf16.xpose.msra.mxu0 0
      %261 = vmatprep.subr.bf16.mxu0 0
      %262 = vmatpush1.bf16.xpose.msra.mxu0 0
      %263 = vmatprep.subr.bf16.mxu0 0
      %264 = vmatpush1.bf16.xpose.msra.mxu0 0
      %265 = vmatprep.subr.bf16.mxu0 0
      %266 = vmatpush1.bf16.xpose.msra.mxu0 0
      %267 = vmatprep.mubr.bf16.mxu0 0
      %268 = vmatmul.mubr.bf16.gmra.mrb[0].mxu0 %v230
      %v269 = vpop.f32.mrb[0].mxu0
      %v270 = vadd.f32 0.0, %v269
      %v271 = vpop.f32.mrb[0].mxu0
      %v272 = vpop.f32.mrb[0].mxu0
      %v273 = vpop.f32.mrb[0].mxu0
      %274 = vdwg.mxu0
      %276 = vrot.lane.b32.xlu0 %v224, 96
      %v277 = vpop.permute.xlu0 %276
      %v279 = vsel %vm228, %v224, 0
      %v282 = vsel %vm228, %v277, 0
      %284 = vmatprep.subr.bf16.mxu0 0
      %285 = vmatpush1.bf16.xpose.msra.mxu0 %v282
      %286 = vmatprep.subr.bf16.mxu0 0
      %287 = vmatpush1.bf16.xpose.msra.mxu0 0
      %288 = vmatprep.subr.bf16.mxu0 0
      %289 = vmatpush1.bf16.xpose.msra.mxu0 0
      %290 = vmatprep.subr.bf16.mxu0 0
      %291 = vmatpush1.bf16.xpose.msra.mxu0 0
      %292 = vmatprep.subr.bf16.mxu0 0
      %293 = vmatpush1.bf16.xpose.msra.mxu0 0
      %294 = vmatprep.subr.bf16.mxu0 0
      %295 = vmatpush1.bf16.xpose.msra.mxu0 0
      %296 = vmatprep.subr.bf16.mxu0 0
      %297 = vmatpush1.bf16.xpose.msra.mxu0 0
      %298 = vmatprep.subr.bf16.mxu0 0
      %299 = vmatpush1.bf16.xpose.msra.mxu0 0
      %300 = vmatprep.subr.bf16.mxu0 0
      %301 = vmatpush1.bf16.xpose.msra.mxu0 0
      %302 = vmatprep.subr.bf16.mxu0 0
      %303 = vmatpush1.bf16.xpose.msra.mxu0 0
      %304 = vmatprep.subr.bf16.mxu0 0
      %305 = vmatpush1.bf16.xpose.msra.mxu0 0
      %306 = vmatprep.subr.bf16.mxu0 0
      %307 = vmatpush1.bf16.xpose.msra.mxu0 0
      %308 = vmatprep.subr.bf16.mxu0 0
      %309 = vmatpush1.bf16.xpose.msra.mxu0 0
      %310 = vmatprep.subr.bf16.mxu0 0
      %311 = vmatpush1.bf16.xpose.msra.mxu0 0
      %312 = vmatprep.subr.bf16.mxu0 0
      %313 = vmatpush1.bf16.xpose.msra.mxu0 0
      %314 = vmatprep.subr.bf16.mxu0 0
      %315 = vmatpush1.bf16.xpose.msra.mxu0 0
      %316 = vmatprep.mubr.bf16.mxu0 0
      %317 = vmatmul.mubr.bf16.gmra.mrb[0].mxu0 %v279
      %v318 = vpop.f32.mrb[0].mxu0
      %v319 = vadd.f32 0.0, %v318
      %v320 = vpop.f32.mrb[0].mxu0
      %v321 = vpop.f32.mrb[0].mxu0
      %v322 = vpop.f32.mrb[0].mxu0
      %323 = vdwg.mxu0
      %v324 = vmul.f32 %v270, 0.35355338
      %v325 = vmul.f32 %v319, 0.35355338
      %v326 = vsel %vm228, %v324, -inf
      %327 = vmax.xlane.f32.xlu0 %v326
      %v328 = vpop.xlane.xlu0 %327
      %v329 = vsel %vm228, %v325, -inf
      %330 = vmax.xlane.f32.xlu0 %v329
      %v331 = vpop.xlane.xlu0 %330
      %v332 = vsub.f32 %v324, %v328
      %v333 = vsub.f32 %v325, %v331
      %v334 = vmul.f32 %v332, 1.442695
      %v335 = vpow.pop %v334
      %v336 = vmul.f32 %v333, 1.442695
      %v337 = vpow.pop %v336
      %v338 = vsel %vm228, %v335, 0.0
      %339 = vadd.xlane.f32.xlu0 %v338
      %v340 = vpop.xlane.xlu0 %339
      %v341 = vsel %vm228, %v337, 0.0
      %342 = vadd.xlane.f32.xlu0 %v341
      %v343 = vpop.xlane.xlu0 %342
      %v344 = vrcp.pop %v340
      %v345 = vrcp.pop %v343
      %v346 = vmul.f32 %v335, %v344
      %v347 = vmul.f32 %v337, %v345
      %v348 = vpack.c.bf16 %v346, %v346
      %v349 = vpack.c.bf16 %v347, %v347
      %350 = vrot.lane.b32.xlu0 %v223, 64
      %v351 = vpop.permute.xlu0 %350
      %v353 = vsel %vm228, %v348, 0
      %vm355 = vcmask 1043456
      %v357 = vsel %vm355, %v351, 0
      %359 = vmatprep.subr.bf16.mxu0 0
      %360 = vmatpush1.bf16.msra.mxu0 %v357
      %361 = vmatprep.subr.bf16.mxu0 0
      %362 = vmatpush1.bf16.msra.mxu0 0
      %363 = vmatprep.subr.bf16.mxu0 0
      %364 = vmatpush1.bf16.msra.mxu0 0
      %365 = vmatprep.subr.bf16.mxu0 0
      %366 = vmatpush1.bf16.msra.mxu0 0
      %367 = vmatprep.subr.bf16.mxu0 0
      %368 = vmatpush1.bf16.msra.mxu0 0
      %369 = vmatprep.subr.bf16.mxu0 0
      %370 = vmatpush1.bf16.msra.mxu0 0
      %371 = vmatprep.subr.bf16.mxu0 0
      %372 = vmatpush1.bf16.msra.mxu0 0
      %373 = vmatprep.subr.bf16.mxu0 0
      %374 = vmatpush1.bf16.msra.mxu0 0
      %375 = vmatprep.subr.bf16.mxu0 0
      %376 = vmatpush1.bf16.msra.mxu0 0
      %377 = vmatprep.subr.bf16.mxu0 0
      %378 = vmatpush1.bf16.msra.mxu0 0
      %379 = vmatprep.subr.bf16.mxu0 0
      %380 = vmatpush1.bf16.msra.mxu0 0
      %381 = vmatprep.subr.bf16.mxu0 0
      %382 = vmatpush1.bf16.msra.mxu0 0
      %383 = vmatprep.subr.bf16.mxu0 0
      %384 = vmatpush1.bf16.msra.mxu0 0
      %385 = vmatprep.subr.bf16.mxu0 0
      %386 = vmatpush1.bf16.msra.mxu0 0
      %387 = vmatprep.subr.bf16.mxu0 0
      %388 = vmatpush1.bf16.msra.mxu0 0
      %389 = vmatprep.subr.bf16.mxu0 0
      %390 = vmatpush1.bf16.msra.mxu0 0
      %391 = vmatprep.mubr.bf16.mxu0 0
      %392 = vmatmul.mubr.bf16.gmra.mrb[0].mxu0 %v353
      %v393 = vpop.f32.mrb[0].mxu0
      %v394 = vadd.f32 0.0, %v393
      %v395 = vpop.f32.mrb[0].mxu0
      %v396 = vpop.f32.mrb[0].mxu0
      %v397 = vpop.f32.mrb[0].mxu0
      %398 = vdwg.mxu0
      %399 = vrot.lane.b32.xlu0 %v224, 64
      %v400 = vpop.permute.xlu0 %399
      %v402 = vsel %vm228, %v349, 0
      %v405 = vsel %vm355, %v400, 0
      %407 = vmatprep.subr.bf16.mxu0 0
      %408 = vmatpush1.bf16.msra.mxu0 %v405
      %409 = vmatprep.subr.bf16.mxu0 0
      %410 = vmatpush1.bf16.msra.mxu0 0
      %411 = vmatprep.subr.bf16.mxu0 0
      %412 = vmatpush1.bf16.msra.mxu0 0
      %413 = vmatprep.subr.bf16.mxu0 0
      %414 = vmatpush1.bf16.msra.mxu0 0
      %415 = vmatprep.subr.bf16.mxu0 0
      %416 = vmatpush1.bf16.msra.mxu0 0
      %417 = vmatprep.subr.bf16.mxu0 0
      %418 = vmatpush1.bf16.msra.mxu0 0
      %419 = vmatprep.subr.bf16.mxu0 0
      %420 = vmatpush1.bf16.msra.mxu0 0
      %421 = vmatprep.subr.bf16.mxu0 0
      %422 = vmatpush1.bf16.msra.mxu0 0
      %423 = vmatprep.subr.bf16.mxu0 0
      %424 = vmatpush1.bf16.msra.mxu0 0
      %425 = vmatprep.subr.bf16.mxu0 0
      %426 = vmatpush1.bf16.msra.mxu0 0
      %427 = vmatprep.subr.bf16.mxu0 0
      %428 = vmatpush1.bf16.msra.mxu0 0
      %429 = vmatprep.subr.bf16.mxu0 0
      %430 = vmatpush1.bf16.msra.mxu0 0
      %431 = vmatprep.subr.bf16.mxu0 0
      %432 = vmatpush1.bf16.msra.mxu0 0
      %433 = vmatprep.subr.bf16.mxu0 0
      %434 = vmatpush1.bf16.msra.mxu0 0
      %435 = vmatprep.subr.bf16.mxu0 0
      %436 = vmatpush1.bf16.msra.mxu0 0
      %437 = vmatprep.subr.bf16.mxu0 0
      %438 = vmatpush1.bf16.msra.mxu0 0
      %439 = vmatprep.mubr.bf16.mxu0 0
      %440 = vmatmul.mubr.bf16.gmra.mrb[0].mxu0 %v402
      %v441 = vpop.f32.mrb[0].mxu0
      %v442 = vadd.f32 0.0, %v441
      %v443 = vpop.f32.mrb[0].mxu0
      %v444 = vpop.f32.mrb[0].mxu0
      %v445 = vpop.f32.mrb[0].mxu0
      %446 = vdwg.mxu0
      %447 = vrot.lane.b32.xlu0 %v223, 120
      %v448 = vpop.permute.xlu0 %447
      %449 = vrot.lane.b32.xlu0 %v223, 88
      %v450 = vpop.permute.xlu0 %449
      %v452 = vsel %vm228, %v448, 0
      %v455 = vsel %vm228, %v450, 0
      %457 = vmatprep.subr.bf16.mxu0 0
      %458 = vmatpush1.bf16.xpose.msra.mxu0 %v455
      %459 = vmatprep.subr.bf16.mxu0 0
      %460 = vmatpush1.bf16.xpose.msra.mxu0 0
      %461 = vmatprep.subr.bf16.mxu0 0
      %462 = vmatpush1.bf16.xpose.msra.mxu0 0
      %463 = vmatprep.subr.bf16.mxu0 0
      %464 = vmatpush1.bf16.xpose.msra.mxu0 0
      %465 = vmatprep.subr.bf16.mxu0 0
      %466 = vmatpush1.bf16.xpose.msra.mxu0 0
      %467 = vmatprep.subr.bf16.mxu0 0
      %468 = vmatpush1.bf16.xpose.msra.mxu0 0
      %469 = vmatprep.subr.bf16.mxu0 0
      %470 = vmatpush1.bf16.xpose.msra.mxu0 0
      %471 = vmatprep.subr.bf16.mxu0 0
      %472 = vmatpush1.bf16.xpose.msra.mxu0 0
      %473 = vmatprep.subr.bf16.mxu0 0
      %474 = vmatpush1.bf16.xpose.msra.mxu0 0
      %475 = vmatprep.subr.bf16.mxu0 0
      %476 = vmatpush1.bf16.xpose.msra.mxu0 0
      %477 = vmatprep.subr.bf16.mxu0 0
      %478 = vmatpush1.bf16.xpose.msra.mxu0 0
      %479 = vmatprep.subr.bf16.mxu0 0
      %480 = vmatpush1.bf16.xpose.msra.mxu0 0
      %481 = vmatprep.subr.bf16.mxu0 0
      %482 = vmatpush1.bf16.xpose.msra.mxu0 0
      %483 = vmatprep.subr.bf16.mxu0 0
      %484 = vmatpush1.bf16.xpose.msra.mxu0 0
      %485 = vmatprep.subr.bf16.mxu0 0
      %486 = vmatpush1.bf16.xpose.msra.mxu0 0
      %487 = vmatprep.subr.bf16.mxu0 0
      %488 = vmatpush1.bf16.xpose.msra.mxu0 0
      %489 = vmatprep.mubr.bf16.mxu0 0
      %490 = vmatmul.mubr.bf16.gmra.mrb[0].mxu0 %v452
      %v491 = vpop.f32.mrb[0].mxu0
      %v492 = vadd.f32 0.0, %v491
      %v493 = vpop.f32.mrb[0].mxu0
      %v494 = vpop.f32.mrb[0].mxu0
      %v495 = vpop.f32.mrb[0].mxu0
      %496 = vdwg.mxu0
      %497 = vrot.lane.b32.xlu0 %v224, 120
      %v498 = vpop.permute.xlu0 %497
      %499 = vrot.lane.b32.xlu0 %v224, 88
      %v500 = vpop.permute.xlu0 %499
      %v502 = vsel %vm228, %v498, 0
      %v505 = vsel %vm228, %v500, 0
      %507 = vmatprep.subr.bf16.mxu0 0
      %508 = vmatpush1.bf16.xpose.msra.mxu0 %v505
      %509 = vmatprep.subr.bf16.mxu0 0
      %510 = vmatpush1.bf16.xpose.msra.mxu0 0
      %511 = vmatprep.subr.bf16.mxu0 0
      %512 = vmatpush1.bf16.xpose.msra.mxu0 0
      %513 = vmatprep.subr.bf16.mxu0 0
      %514 = vmatpush1.bf16.xpose.msra.mxu0 0
      %515 = vmatprep.subr.bf16.mxu0 0
      %516 = vmatpush1.bf16.xpose.msra.mxu0 0
      %517 = vmatprep.subr.bf16.mxu0 0
      %518 = vmatpush1.bf16.xpose.msra.mxu0 0
      %519 = vmatprep.subr.bf16.mxu0 0
      %520 = vmatpush1.bf16.xpose.msra.mxu0 0
      %521 = vmatprep.subr.bf16.mxu0 0
      %522 = vmatpush1.bf16.xpose.msra.mxu0 0
      %523 = vmatprep.subr.bf16.mxu0 0
      %524 = vmatpush1.bf16.xpose.msra.mxu0 0
      %525 = vmatprep.subr.bf16.mxu0 0
      %526 = vmatpush1.bf16.xpose.msra.mxu0 0
      %527 = vmatprep.subr.bf16.mxu0 0
      %528 = vmatpush1.bf16.xpose.msra.mxu0 0
      %529 = vmatprep.subr.bf16.mxu0 0
      %530 = vmatpush1.bf16.xpose.msra.mxu0 0
      %531 = vmatprep.subr.bf16.mxu0 0
      %532 = vmatpush1.bf16.xpose.msra.mxu0 0
      %533 = vmatprep.subr.bf16.mxu0 0
      %534 = vmatpush1.bf16.xpose.msra.mxu0 0
      %535 = vmatprep.subr.bf16.mxu0 0
      %536 = vmatpush1.bf16.xpose.msra.mxu0 0
      %537 = vmatprep.subr.bf16.mxu0 0
      %538 = vmatpush1.bf16.xpose.msra.mxu0 0
      %539 = vmatprep.mubr.bf16.mxu0 0
      %540 = vmatmul.mubr.bf16.gmra.mrb[0].mxu0 %v502
      %v541 = vpop.f32.mrb[0].mxu0
      %v542 = vadd.f32 0.0, %v541
      %v543 = vpop.f32.mrb[0].mxu0
      %v544 = vpop.f32.mrb[0].mxu0
      %v545 = vpop.f32.mrb[0].mxu0
      %546 = vdwg.mxu0
      %v547 = vmul.f32 %v492, 0.35355338
      %v548 = vmul.f32 %v542, 0.35355338
      %v549 = vsel %vm228, %v547, -inf
      %550 = vmax.xlane.f32.xlu0 %v549
      %v551 = vpop.xlane.xlu0 %550
      %v552 = vsel %vm228, %v548, -inf
      %553 = vmax.xlane.f32.xlu0 %v552
      %v554 = vpop.xlane.xlu0 %553
      %v555 = vsub.f32 %v547, %v551
      %v556 = vsub.f32 %v548, %v554
      %v557 = vmul.f32 %v555, 1.442695
      %v558 = vpow.pop %v557
      %v559 = vmul.f32 %v556, 1.442695
      %v560 = vpow.pop %v559
      %v561 = vsel %vm228, %v558, 0.0
      %562 = vadd.xlane.f32.xlu0 %v561
      %v563 = vpop.xlane.xlu0 %562
      %v564 = vsel %vm228, %v560, 0.0
      %565 = vadd.xlane.f32.xlu0 %v564
      %v566 = vpop.xlane.xlu0 %565
      %v567 = vrcp.pop %v563
      %v568 = vrcp.pop %v566
      %v569 = vmul.f32 %v558, %v567
      %v570 = vmul.f32 %v560, %v568
      %v571 = vpack.c.bf16 %v569, %v569
      %v572 = vpack.c.bf16 %v570, %v570
      %573 = vrot.lane.b32.xlu0 %v223, 56
      %v574 = vpop.permute.xlu0 %573
      %v576 = vsel %vm228, %v571, 0
      %v579 = vsel %vm355, %v574, 0
      %581 = vmatprep.subr.bf16.mxu0 0
      %582 = vmatpush1.bf16.msra.mxu0 %v579
      %583 = vmatprep.subr.bf16.mxu0 0
      %584 = vmatpush1.bf16.msra.mxu0 0
      %585 = vmatprep.subr.bf16.mxu0 0
      %586 = vmatpush1.bf16.msra.mxu0 0
      %587 = vmatprep.subr.bf16.mxu0 0
      %588 = vmatpush1.bf16.msra.mxu0 0
      %589 = vmatprep.subr.bf16.mxu0 0
      %590 = vmatpush1.bf16.msra.mxu0 0
      %591 = vmatprep.subr.bf16.mxu0 0
      %592 = vmatpush1.bf16.msra.mxu0 0
      %593 = vmatprep.subr.bf16.mxu0 0
      %594 = vmatpush1.bf16.msra.mxu0 0
      %595 = vmatprep.subr.bf16.mxu0 0
      %596 = vmatpush1.bf16.msra.mxu0 0
      %597 = vmatprep.subr.bf16.mxu0 0
      %598 = vmatpush1.bf16.msra.mxu0 0
      %599 = vmatprep.subr.bf16.mxu0 0
      %600 = vmatpush1.bf16.msra.mxu0 0
      %601 = vmatprep.subr.bf16.mxu0 0
      %602 = vmatpush1.bf16.msra.mxu0 0
      %603 = vmatprep.subr.bf16.mxu0 0
      %604 = vmatpush1.bf16.msra.mxu0 0
      %605 = vmatprep.subr.bf16.mxu0 0
      %606 = vmatpush1.bf16.msra.mxu0 0
      %607 = vmatprep.subr.bf16.mxu0 0
      %608 = vmatpush1.bf16.msra.mxu0 0
      %609 = vmatprep.subr.bf16.mxu0 0
      %610 = vmatpush1.bf16.msra.mxu0 0
      %611 = vmatprep.subr.bf16.mxu0 0
      %612 = vmatpush1.bf16.msra.mxu0 0
      %613 = vmatprep.mubr.bf16.mxu0 0
      %614 = vmatmul.mubr.bf16.gmra.mrb[0].mxu0 %v576
      %v615 = vpop.f32.mrb[0].mxu0
      %v616 = vadd.f32 0.0, %v615
      %v617 = vpop.f32.mrb[0].mxu0
      %v618 = vpop.f32.mrb[0].mxu0
      %v619 = vpop.f32.mrb[0].mxu0
      %620 = vdwg.mxu0
      %621 = vrot.lane.b32.xlu0 %v224, 56
      %v622 = vpop.permute.xlu0 %621
      %v624 = vsel %vm228, %v572, 0
      %v627 = vsel %vm355, %v622, 0
      %629 = vmatprep.subr.bf16.mxu0 0
      %630 = vmatpush1.bf16.msra.mxu0 %v627
      %631 = vmatprep.subr.bf16.mxu0 0
      %632 = vmatpush1.bf16.msra.mxu0 0
      %633 = vmatprep.subr.bf16.mxu0 0
      %634 = vmatpush1.bf16.msra.mxu0 0
      %635 = vmatprep.subr.bf16.mxu0 0
      %636 = vmatpush1.bf16.msra.mxu0 0
      %637 = vmatprep.subr.bf16.mxu0 0
      %638 = vmatpush1.bf16.msra.mxu0 0
      %639 = vmatprep.subr.bf16.mxu0 0
      %640 = vmatpush1.bf16.msra.mxu0 0
      %641 = vmatprep.subr.bf16.mxu0 0
      %642 = vmatpush1.bf16.msra.mxu0 0
      %643 = vmatprep.subr.bf16.mxu0 0
      %644 = vmatpush1.bf16.msra.mxu0 0
      %645 = vmatprep.subr.bf16.mxu0 0
      %646 = vmatpush1.bf16.msra.mxu0 0
      %647 = vmatprep.subr.bf16.mxu0 0
      %648 = vmatpush1.bf16.msra.mxu0 0
      %649 = vmatprep.subr.bf16.mxu0 0
      %650 = vmatpush1.bf16.msra.mxu0 0
      %651 = vmatprep.subr.bf16.mxu0 0
      %652 = vmatpush1.bf16.msra.mxu0 0
      %653 = vmatprep.subr.bf16.mxu0 0
      %654 = vmatpush1.bf16.msra.mxu0 0
      %655 = vmatprep.subr.bf16.mxu0 0
      %656 = vmatpush1.bf16.msra.mxu0 0
      %657 = vmatprep.subr.bf16.mxu0 0
      %658 = vmatpush1.bf16.msra.mxu0 0
      %659 = vmatprep.subr.bf16.mxu0 0
      %660 = vmatpush1.bf16.msra.mxu0 0
      %661 = vmatprep.mubr.bf16.mxu0 0
      %662 = vmatmul.mubr.bf16.gmra.mrb[0].mxu0 %v624
      %v663 = vpop.f32.mrb[0].mxu0
      %v664 = vadd.f32 0.0, %v663
      %v665 = vpop.f32.mrb[0].mxu0
      %v666 = vpop.f32.mrb[0].mxu0
      %v667 = vpop.f32.mrb[0].mxu0
      %668 = vdwg.mxu0
      %669 = vrot.lane.b32.xlu0 %v223, 112
      %v670 = vpop.permute.xlu0 %669
      %671 = vrot.lane.b32.xlu0 %v223, 80
      %v672 = vpop.permute.xlu0 %671
      %v674 = vsel %vm228, %v670, 0
      %v677 = vsel %vm228, %v672, 0
      %679 = vmatprep.subr.bf16.mxu0 0
      %680 = vmatpush1.bf16.xpose.msra.mxu0 %v677
      %681 = vmatprep.subr.bf16.mxu0 0
      %682 = vmatpush1.bf16.xpose.msra.mxu0 0
      %683 = vmatprep.subr.bf16.mxu0 0
      %684 = vmatpush1.bf16.xpose.msra.mxu0 0
      %685 = vmatprep.subr.bf16.mxu0 0
      %686 = vmatpush1.bf16.xpose.msra.mxu0 0
      %687 = vmatprep.subr.bf16.mxu0 0
      %688 = vmatpush1.bf16.xpose.msra.mxu0 0
      %689 = vmatprep.subr.bf16.mxu0 0
      %690 = vmatpush1.bf16.xpose.msra.mxu0 0
      %691 = vmatprep.subr.bf16.mxu0 0
      %692 = vmatpush1.bf16.xpose.msra.mxu0 0
      %693 = vmatprep.subr.bf16.mxu0 0
      %694 = vmatpush1.bf16.xpose.msra.mxu0 0
      %695 = vmatprep.subr.bf16.mxu0 0
      %696 = vmatpush1.bf16.xpose.msra.mxu0 0
      %697 = vmatprep.subr.bf16.mxu0 0
      %698 = vmatpush1.bf16.xpose.msra.mxu0 0
      %699 = vmatprep.subr.bf16.mxu0 0
      %700 = vmatpush1.bf16.xpose.msra.mxu0 0
      %701 = vmatprep.subr.bf16.mxu0 0
      %702 = vmatpush1.bf16.xpose.msra.mxu0 0
      %703 = vmatprep.subr.bf16.mxu0 0
      %704 = vmatpush1.bf16.xpose.msra.mxu0 0
      %705 = vmatprep.subr.bf16.mxu0 0
      %706 = vmatpush1.bf16.xpose.msra.mxu0 0
      %707 = vmatprep.subr.bf16.mxu0 0
      %708 = vmatpush1.bf16.xpose.msra.mxu0 0
      %709 = vmatprep.subr.bf16.mxu0 0
      %710 = vmatpush1.bf16.xpose.msra.mxu0 0
      %711 = vmatprep.mubr.bf16.mxu0 0
      %712 = vmatmul.mubr.bf16.gmra.mrb[0].mxu0 %v674
      %v713 = vpop.f32.mrb[0].mxu0
      %v714 = vadd.f32 0.0, %v713
      %v715 = vpop.f32.mrb[0].mxu0
      %v716 = vpop.f32.mrb[0].mxu0
      %v717 = vpop.f32.mrb[0].mxu0
      %718 = vdwg.mxu0
      %719 = vrot.lane.b32.xlu0 %v224, 112
      %v720 = vpop.permute.xlu0 %719
      %721 = vrot.lane.b32.xlu0 %v224, 80
      %v722 = vpop.permute.xlu0 %721
      %v724 = vsel %vm228, %v720, 0
      %v727 = vsel %vm228, %v722, 0
      %729 = vmatprep.subr.bf16.mxu0 0
      %730 = vmatpush1.bf16.xpose.msra.mxu0 %v727
      %731 = vmatprep.subr.bf16.mxu0 0
      %732 = vmatpush1.bf16.xpose.msra.mxu0 0
      %733 = vmatprep.subr.bf16.mxu0 0
      %734 = vmatpush1.bf16.xpose.msra.mxu0 0
      %735 = vmatprep.subr.bf16.mxu0 0
      %736 = vmatpush1.bf16.xpose.msra.mxu0 0
      %737 = vmatprep.subr.bf16.mxu0 0
      %738 = vmatpush1.bf16.xpose.msra.mxu0 0
      %739 = vmatprep.subr.bf16.mxu0 0
      %740 = vmatpush1.bf16.xpose.msra.mxu0 0
      %741 = vmatprep.subr.bf16.mxu0 0
      %742 = vmatpush1.bf16.xpose.msra.mxu0 0
      %743 = vmatprep.subr.bf16.mxu0 0
      %744 = vmatpush1.bf16.xpose.msra.mxu0 0
      %745 = vmatprep.subr.bf16.mxu0 0
      %746 = vmatpush1.bf16.xpose.msra.mxu0 0
      %747 = vmatprep.subr.bf16.mxu0 0
      %748 = vmatpush1.bf16.xpose.msra.mxu0 0
      %749 = vmatprep.subr.bf16.mxu0 0
      %750 = vmatpush1.bf16.xpose.msra.mxu0 0
      %751 = vmatprep.subr.bf16.mxu0 0
      %752 = vmatpush1.bf16.xpose.msra.mxu0 0
      %753 = vmatprep.subr.bf16.mxu0 0
      %754 = vmatpush1.bf16.xpose.msra.mxu0 0
      %755 = vmatprep.subr.bf16.mxu0 0
      %756 = vmatpush1.bf16.xpose.msra.mxu0 0
      %757 = vmatprep.subr.bf16.mxu0 0
      %758 = vmatpush1.bf16.xpose.msra.mxu0 0
      %759 = vmatprep.subr.bf16.mxu0 0
      %760 = vmatpush1.bf16.xpose.msra.mxu0 0
      %761 = vmatprep.mubr.bf16.mxu0 0
      %762 = vmatmul.mubr.bf16.gmra.mrb[0].mxu0 %v724
      %v763 = vpop.f32.mrb[0].mxu0
      %v764 = vadd.f32 0.0, %v763
      %v765 = vpop.f32.mrb[0].mxu0
      %v766 = vpop.f32.mrb[0].mxu0
      %v767 = vpop.f32.mrb[0].mxu0
      %768 = vdwg.mxu0
      %v769 = vmul.f32 %v714, 0.35355338
      %v770 = vmul.f32 %v764, 0.35355338
      %v771 = vsel %vm228, %v769, -inf
      %772 = vmax.xlane.f32.xlu0 %v771
      %v773 = vpop.xlane.xlu0 %772
      %v774 = vsel %vm228, %v770, -inf
      %775 = vmax.xlane.f32.xlu0 %v774
      %v776 = vpop.xlane.xlu0 %775
      %v777 = vsub.f32 %v769, %v773
      %v778 = vsub.f32 %v770, %v776
      %v779 = vmul.f32 %v777, 1.442695
      %v780 = vpow.pop %v779
      %v781 = vmul.f32 %v778, 1.442695
      %v782 = vpow.pop %v781
      %v783 = vsel %vm228, %v780, 0.0
      %784 = vadd.xlane.f32.xlu0 %v783
      %v785 = vpop.xlane.xlu0 %784
      %v786 = vsel %vm228, %v782, 0.0
      %787 = vadd.xlane.f32.xlu0 %v786
      %v788 = vpop.xlane.xlu0 %787
      %v789 = vrcp.pop %v785
      %v790 = vrcp.pop %v788
      %v791 = vmul.f32 %v780, %v789
      %v792 = vmul.f32 %v782, %v790
      %v793 = vpack.c.bf16 %v791, %v791
      %v794 = vpack.c.bf16 %v792, %v792
      %795 = vrot.lane.b32.xlu0 %v223, 48
      %v796 = vpop.permute.xlu0 %795
      %v798 = vsel %vm228, %v793, 0
      %v801 = vsel %vm355, %v796, 0
      %803 = vmatprep.subr.bf16.mxu0 0
      %804 = vmatpush1.bf16.msra.mxu0 %v801
      %805 = vmatprep.subr.bf16.mxu0 0
      %806 = vmatpush1.bf16.msra.mxu0 0
      %807 = vmatprep.subr.bf16.mxu0 0
      %808 = vmatpush1.bf16.msra.mxu0 0
      %809 = vmatprep.subr.bf16.mxu0 0
      %810 = vmatpush1.bf16.msra.mxu0 0
      %811 = vmatprep.subr.bf16.mxu0 0
      %812 = vmatpush1.bf16.msra.mxu0 0
      %813 = vmatprep.subr.bf16.mxu0 0
      %814 = vmatpush1.bf16.msra.mxu0 0
      %815 = vmatprep.subr.bf16.mxu0 0
      %816 = vmatpush1.bf16.msra.mxu0 0
      %817 = vmatprep.subr.bf16.mxu0 0
      %818 = vmatpush1.bf16.msra.mxu0 0
      %819 = vmatprep.subr.bf16.mxu0 0
      %820 = vmatpush1.bf16.msra.mxu0 0
      %821 = vmatprep.subr.bf16.mxu0 0
      %822 = vmatpush1.bf16.msra.mxu0 0
      %823 = vmatprep.subr.bf16.mxu0 0
      %824 = vmatpush1.bf16.msra.mxu0 0
      %825 = vmatprep.subr.bf16.mxu0 0
      %826 = vmatpush1.bf16.msra.mxu0 0
      %827 = vmatprep.subr.bf16.mxu0 0
      %828 = vmatpush1.bf16.msra.mxu0 0
      %829 = vmatprep.subr.bf16.mxu0 0
      %830 = vmatpush1.bf16.msra.mxu0 0
      %831 = vmatprep.subr.bf16.mxu0 0
      %832 = vmatpush1.bf16.msra.mxu0 0
      %833 = vmatprep.subr.bf16.mxu0 0
      %834 = vmatpush1.bf16.msra.mxu0 0
      %835 = vmatprep.mubr.bf16.mxu0 0
      %836 = vmatmul.mubr.bf16.gmra.mrb[0].mxu0 %v798
      %v837 = vpop.f32.mrb[0].mxu0
      %v838 = vadd.f32 0.0, %v837
      %v839 = vpop.f32.mrb[0].mxu0
      %v840 = vpop.f32.mrb[0].mxu0
      %v841 = vpop.f32.mrb[0].mxu0
      %842 = vdwg.mxu0
      %843 = vrot.lane.b32.xlu0 %v224, 48
      %v844 = vpop.permute.xlu0 %843
      %v846 = vsel %vm228, %v794, 0
      %v849 = vsel %vm355, %v844, 0
      %851 = vmatprep.subr.bf16.mxu0 0
      %852 = vmatpush1.bf16.msra.mxu0 %v849
      %853 = vmatprep.subr.bf16.mxu0 0
      %854 = vmatpush1.bf16.msra.mxu0 0
      %855 = vmatprep.subr.bf16.mxu0 0
      %856 = vmatpush1.bf16.msra.mxu0 0
      %857 = vmatprep.subr.bf16.mxu0 0
      %858 = vmatpush1.bf16.msra.mxu0 0
      %859 = vmatprep.subr.bf16.mxu0 0
      %860 = vmatpush1.bf16.msra.mxu0 0
      %861 = vmatprep.subr.bf16.mxu0 0
      %862 = vmatpush1.bf16.msra.mxu0 0
      %863 = vmatprep.subr.bf16.mxu0 0
      %864 = vmatpush1.bf16.msra.mxu0 0
      %865 = vmatprep.subr.bf16.mxu0 0
      %866 = vmatpush1.bf16.msra.mxu0 0
      %867 = vmatprep.subr.bf16.mxu0 0
      %868 = vmatpush1.bf16.msra.mxu0 0
      %869 = vmatprep.subr.bf16.mxu0 0
      %870 = vmatpush1.bf16.msra.mxu0 0
      %871 = vmatprep.subr.bf16.mxu0 0
      %872 = vmatpush1.bf16.msra.mxu0 0
      %873 = vmatprep.subr.bf16.mxu0 0
      %874 = vmatpush1.bf16.msra.mxu0 0
      %875 = vmatprep.subr.bf16.mxu0 0
      %876 = vmatpush1.bf16.msra.mxu0 0
      %877 = vmatprep.subr.bf16.mxu0 0
      %878 = vmatpush1.bf16.msra.mxu0 0
      %879 = vmatprep.subr.bf16.mxu0 0
      %880 = vmatpush1.bf16.msra.mxu0 0
      %881 = vmatprep.subr.bf16.mxu0 0
      %882 = vmatpush1.bf16.msra.mxu0 0
      %883 = vmatprep.mubr.bf16.mxu0 0
      %884 = vmatmul.mubr.bf16.gmra.mrb[0].mxu0 %v846
      %v885 = vpop.f32.mrb[0].mxu0
      %v886 = vadd.f32 0.0, %v885
      %v887 = vpop.f32.mrb[0].mxu0
      %v888 = vpop.f32.mrb[0].mxu0
      %v889 = vpop.f32.mrb[0].mxu0
      %890 = vdwg.mxu0
      %891 = vrot.lane.b32.xlu0 %v223, 104
      %v892 = vpop.permute.xlu0 %891
      %893 = vrot.lane.b32.xlu0 %v223, 72
      %v894 = vpop.permute.xlu0 %893
      %v896 = vsel %vm228, %v892, 0
      %v899 = vsel %vm228, %v894, 0
      %901 = vmatprep.subr.bf16.mxu0 0
      %902 = vmatpush1.bf16.xpose.msra.mxu0 %v899
      %903 = vmatprep.subr.bf16.mxu0 0
      %904 = vmatpush1.bf16.xpose.msra.mxu0 0
      %905 = vmatprep.subr.bf16.mxu0 0
      %906 = vmatpush1.bf16.xpose.msra.mxu0 0
      %907 = vmatprep.subr.bf16.mxu0 0
      %908 = vmatpush1.bf16.xpose.msra.mxu0 0
      %909 = vmatprep.subr.bf16.mxu0 0
      %910 = vmatpush1.bf16.xpose.msra.mxu0 0
      %911 = vmatprep.subr.bf16.mxu0 0
      %912 = vmatpush1.bf16.xpose.msra.mxu0 0
      %913 = vmatprep.subr.bf16.mxu0 0
      %914 = vmatpush1.bf16.xpose.msra.mxu0 0
      %915 = vmatprep.subr.bf16.mxu0 0
      %916 = vmatpush1.bf16.xpose.msra.mxu0 0
      %917 = vmatprep.subr.bf16.mxu0 0
      %918 = vmatpush1.bf16.xpose.msra.mxu0 0
      %919 = vmatprep.subr.bf16.mxu0 0
      %920 = vmatpush1.bf16.xpose.msra.mxu0 0
      %921 = vmatprep.subr.bf16.mxu0 0
      %922 = vmatpush1.bf16.xpose.msra.mxu0 0
      %923 = vmatprep.subr.bf16.mxu0 0
      %924 = vmatpush1.bf16.xpose.msra.mxu0 0
      %925 = vmatprep.subr.bf16.mxu0 0
      %926 = vmatpush1.bf16.xpose.msra.mxu0 0
      %927 = vmatprep.subr.bf16.mxu0 0
      %928 = vmatpush1.bf16.xpose.msra.mxu0 0
      %929 = vmatprep.subr.bf16.mxu0 0
      %930 = vmatpush1.bf16.xpose.msra.mxu0 0
      %931 = vmatprep.subr.bf16.mxu0 0
      %932 = vmatpush1.bf16.xpose.msra.mxu0 0
      %933 = vmatprep.mubr.bf16.mxu0 0
      %934 = vmatmul.mubr.bf16.gmra.mrb[0].mxu0 %v896
      %v935 = vpop.f32.mrb[0].mxu0
      %v936 = vadd.f32 0.0, %v935
      %v937 = vpop.f32.mrb[0].mxu0
      %v938 = vpop.f32.mrb[0].mxu0
      %v939 = vpop.f32.mrb[0].mxu0
      %940 = vdwg.mxu0
      %941 = vrot.lane.b32.xlu0 %v224, 104
      %v942 = vpop.permute.xlu0 %941
      %943 = vrot.lane.b32.xlu0 %v224, 72
      %v944 = vpop.permute.xlu0 %943
      %v946 = vsel %vm228, %v942, 0
      %v949 = vsel %vm228, %v944, 0
      %951 = vmatprep.subr.bf16.mxu0 0
      %952 = vmatpush1.bf16.xpose.msra.mxu0 %v949
      %953 = vmatprep.subr.bf16.mxu0 0
      %954 = vmatpush1.bf16.xpose.msra.mxu0 0
      %955 = vmatprep.subr.bf16.mxu0 0
      %956 = vmatpush1.bf16.xpose.msra.mxu0 0
      %957 = vmatprep.subr.bf16.mxu0 0
      %958 = vmatpush1.bf16.xpose.msra.mxu0 0
      %959 = vmatprep.subr.bf16.mxu0 0
      %960 = vmatpush1.bf16.xpose.msra.mxu0 0
      %961 = vmatprep.subr.bf16.mxu0 0
      %962 = vmatpush1.bf16.xpose.msra.mxu0 0
      %963 = vmatprep.subr.bf16.mxu0 0
      %964 = vmatpush1.bf16.xpose.msra.mxu0 0
      %965 = vmatprep.subr.bf16.mxu0 0
      %966 = vmatpush1.bf16.xpose.msra.mxu0 0
      %967 = vmatprep.subr.bf16.mxu0 0
      %968 = vmatpush1.bf16.xpose.msra.mxu0 0
      %969 = vmatprep.subr.bf16.mxu0 0
      %970 = vmatpush1.bf16.xpose.msra.mxu0 0
      %971 = vmatprep.subr.bf16.mxu0 0
      %972 = vmatpush1.bf16.xpose.msra.mxu0 0
      %973 = vmatprep.subr.bf16.mxu0 0
      %974 = vmatpush1.bf16.xpose.msra.mxu0 0
      %975 = vmatprep.subr.bf16.mxu0 0
      %976 = vmatpush1.bf16.xpose.msra.mxu0 0
      %977 = vmatprep.subr.bf16.mxu0 0
      %978 = vmatpush1.bf16.xpose.msra.mxu0 0
      %979 = vmatprep.subr.bf16.mxu0 0
      %980 = vmatpush1.bf16.xpose.msra.mxu0 0
      %981 = vmatprep.subr.bf16.mxu0 0
      %982 = vmatpush1.bf16.xpose.msra.mxu0 0
      %983 = vmatprep.mubr.bf16.mxu0 0
      %984 = vmatmul.mubr.bf16.gmra.mrb[0].mxu0 %v946
      %v985 = vpop.f32.mrb[0].mxu0
      %v986 = vadd.f32 0.0, %v985
      %v987 = vpop.f32.mrb[0].mxu0
      %v988 = vpop.f32.mrb[0].mxu0
      %v989 = vpop.f32.mrb[0].mxu0
      %990 = vdwg.mxu0
      %v991 = vmul.f32 %v936, 0.35355338
      %v992 = vmul.f32 %v986, 0.35355338
      %v993 = vsel %vm228, %v991, -inf
      %994 = vmax.xlane.f32.xlu0 %v993
      %v995 = vpop.xlane.xlu0 %994
      %v996 = vsel %vm228, %v992, -inf
      %997 = vmax.xlane.f32.xlu0 %v996
      %v998 = vpop.xlane.xlu0 %997
      %v999 = vsub.f32 %v991, %v995
      %v1000 = vsub.f32 %v992, %v998
      %v1001 = vmul.f32 %v999, 1.442695
      %v1002 = vpow.pop %v1001
      %v1003 = vmul.f32 %v1000, 1.442695
      %v1004 = vpow.pop %v1003
      %v1005 = vsel %vm228, %v1002, 0.0
      %1006 = vadd.xlane.f32.xlu0 %v1005
      %v1007 = vpop.xlane.xlu0 %1006
      %v1008 = vsel %vm228, %v1004, 0.0
      %1009 = vadd.xlane.f32.xlu0 %v1008
      %v1010 = vpop.xlane.xlu0 %1009
      %v1011 = vrcp.pop %v1007
      %v1012 = vrcp.pop %v1010
      %v1013 = vmul.f32 %v1002, %v1011
      %v1014 = vmul.f32 %v1004, %v1012
      %v1015 = vpack.c.bf16 %v1013, %v1013
      %v1016 = vpack.c.bf16 %v1014, %v1014
      %1017 = vrot.lane.b32.xlu0 %v223, 40
      %v1018 = vpop.permute.xlu0 %1017
      %v1020 = vsel %vm228, %v1015, 0
      %v1023 = vsel %vm355, %v1018, 0
      %1025 = vmatprep.subr.bf16.mxu0 0
      %1026 = vmatpush1.bf16.msra.mxu0 %v1023
      %1027 = vmatprep.subr.bf16.mxu0 0
      %1028 = vmatpush1.bf16.msra.mxu0 0
      %1029 = vmatprep.subr.bf16.mxu0 0
      %1030 = vmatpush1.bf16.msra.mxu0 0
      %1031 = vmatprep.subr.bf16.mxu0 0
      %1032 = vmatpush1.bf16.msra.mxu0 0
      %1033 = vmatprep.subr.bf16.mxu0 0
      %1034 = vmatpush1.bf16.msra.mxu0 0
      %1035 = vmatprep.subr.bf16.mxu0 0
      %1036 = vmatpush1.bf16.msra.mxu0 0
      %1037 = vmatprep.subr.bf16.mxu0 0
      %1038 = vmatpush1.bf16.msra.mxu0 0
      %1039 = vmatprep.subr.bf16.mxu0 0
      %1040 = vmatpush1.bf16.msra.mxu0 0
      %1041 = vmatprep.subr.bf16.mxu0 0
      %1042 = vmatpush1.bf16.msra.mxu0 0
      %1043 = vmatprep.subr.bf16.mxu0 0
      %1044 = vmatpush1.bf16.msra.mxu0 0
      %1045 = vmatprep.subr.bf16.mxu0 0
      %1046 = vmatpush1.bf16.msra.mxu0 0
      %1047 = vmatprep.subr.bf16.mxu0 0
      %1048 = vmatpush1.bf16.msra.mxu0 0
      %1049 = vmatprep.subr.bf16.mxu0 0
      %1050 = vmatpush1.bf16.msra.mxu0 0
      %1051 = vmatprep.subr.bf16.mxu0 0
      %1052 = vmatpush1.bf16.msra.mxu0 0
      %1053 = vmatprep.subr.bf16.mxu0 0
      %1054 = vmatpush1.bf16.msra.mxu0 0
      %1055 = vmatprep.subr.bf16.mxu0 0
      %1056 = vmatpush1.bf16.msra.mxu0 0
      %1057 = vmatprep.mubr.bf16.mxu0 0
      %1058 = vmatmul.mubr.bf16.gmra.mrb[0].mxu0 %v1020
      %v1059 = vpop.f32.mrb[0].mxu0
      %v1060 = vadd.f32 0.0, %v1059
      %v1061 = vpop.f32.mrb[0].mxu0
      %v1062 = vpop.f32.mrb[0].mxu0
      %v1063 = vpop.f32.mrb[0].mxu0
      %1064 = vdwg.mxu0
      %1065 = vrot.lane.b32.xlu0 %v224, 40
      %v1066 = vpop.permute.xlu0 %1065
      %v1068 = vsel %vm228, %v1016, 0
      %v1071 = vsel %vm355, %v1066, 0
      %1073 = vmatprep.subr.bf16.mxu0 0
      %1074 = vmatpush1.bf16.msra.mxu0 %v1071
      %1075 = vmatprep.subr.bf16.mxu0 0
      %1076 = vmatpush1.bf16.msra.mxu0 0
      %1077 = vmatprep.subr.bf16.mxu0 0
      %1078 = vmatpush1.bf16.msra.mxu0 0
      %1079 = vmatprep.subr.bf16.mxu0 0
      %1080 = vmatpush1.bf16.msra.mxu0 0
      %1081 = vmatprep.subr.bf16.mxu0 0
      %1082 = vmatpush1.bf16.msra.mxu0 0
      %1083 = vmatprep.subr.bf16.mxu0 0
      %1084 = vmatpush1.bf16.msra.mxu0 0
      %1085 = vmatprep.subr.bf16.mxu0 0
      %1086 = vmatpush1.bf16.msra.mxu0 0
      %1087 = vmatprep.subr.bf16.mxu0 0
      %1088 = vmatpush1.bf16.msra.mxu0 0
      %1089 = vmatprep.subr.bf16.mxu0 0
      %1090 = vmatpush1.bf16.msra.mxu0 0
      %1091 = vmatprep.subr.bf16.mxu0 0
      %1092 = vmatpush1.bf16.msra.mxu0 0
      %1093 = vmatprep.subr.bf16.mxu0 0
      %1094 = vmatpush1.bf16.msra.mxu0 0
      %1095 = vmatprep.subr.bf16.mxu0 0
      %1096 = vmatpush1.bf16.msra.mxu0 0
      %1097 = vmatprep.subr.bf16.mxu0 0
      %1098 = vmatpush1.bf16.msra.mxu0 0
      %1099 = vmatprep.subr.bf16.mxu0 0
      %1100 = vmatpush1.bf16.msra.mxu0 0
      %1101 = vmatprep.subr.bf16.mxu0 0
      %1102 = vmatpush1.bf16.msra.mxu0 0
      %1103 = vmatprep.subr.bf16.mxu0 0
      %1104 = vmatpush1.bf16.msra.mxu0 0
      %1105 = vmatprep.mubr.bf16.mxu0 0
      %1106 = vmatmul.mubr.bf16.gmra.mrb[0].mxu0 %v1068
      %v1107 = vpop.f32.mrb[0].mxu0
      %v1108 = vadd.f32 0.0, %v1107
      %v1109 = vpop.f32.mrb[0].mxu0
      %v1110 = vpop.f32.mrb[0].mxu0
      %v1111 = vpop.f32.mrb[0].mxu0
      %1112 = vdwg.mxu0
      %1115 = vrot.lane.b32.xlu0 %v616, 8
      %v1116 = vpop.permute.xlu0 %1115
      %1117 = vrot.lane.b32.xlu0 %v664, 8
      %v1118 = vpop.permute.xlu0 %1117
      %1123 = vrot.lane.b32.xlu0 %v838, 16
      %v1124 = vpop.permute.xlu0 %1123
      %1125 = vrot.lane.b32.xlu0 %v886, 16
      %v1126 = vpop.permute.xlu0 %1125
      %1131 = vrot.lane.b32.xlu0 %v1060, 24
      %v1132 = vpop.permute.xlu0 %1131
      %1133 = vrot.lane.b32.xlu0 %v1108, 24
      %v1134 = vpop.permute.xlu0 %1133
      %v1137 = vsel %vm228, %v394, %v1116
      %v1138 = vsel %vm228, %v442, %v1118
      %vm1139 = vcmask 130048
      %v1140 = vsel %vm1139, %v1137, %v1124
      %v1141 = vsel %vm1139, %v1138, %v1126
      %vm1142 = vcmask 195584
      %v1143 = vsel %vm1142, %v1140, %v1132
      %v1144 = vsel %vm1142, %v1141, %v1134
      %v1145 = vtanh.pop %v1143
      %v1146 = vtanh.pop %v1144
      %1147 = vst.msk [vmem:[#allocation2] sm:$0xff] %vm140, %v1145
      %1148 = vst.msk [vmem:[#allocation2 + $0x8] sm:$0xff] %vm140, %v1146
    $region38: #{tpu_custom_call.1} parent=1 // loop_footer
      %s148 = sadd.s32 1, %s144
    $region39: #{tpu_custom_call.1} parent=1 // loop_footer_branch
      %143 = sbr.rel target = $region35
    $region40: #{tpu_custom_call.1} parent=1 // loop_exit
      _
    %v1149 = vld [vmem:[#allocation2] ss:$8 sm:$0x3]
    %v1150 = vpack.c.bf16 %v1149, %v1149
    %v1151 = vld [vmem:[%s4] sm:$0xf]
    %v1152 = vld [vmem:[%s4 + $0x4] sm:$0xf]
    %v1153 = vld [vmem:[%s4 + $0x8] sm:$0xf]
    %v1154 = vld [vmem:[%s4 + $0xc] sm:$0xf]
    %v1155 = vld [vmem:[%s5] sm:$0x1]
    %v1157 = vlaneseq
    %v1158 = vshrl.u32 %v1157, 7
    %v1159 = vsub.s32 0, %v1158
    %v1160 = vrot.slane %v1155, %v1159
    %v1166 = vunpack.c.l.b16 %v1151
    %v1167 = vunpack.c.l.b16 %v1152
    %v1168 = vunpack.c.l.b16 %v1153
    %v1169 = vunpack.c.l.b16 %v1154
    %v1170 = vpack.c.b16 %v1167, %v1166
    %v1171 = vpack.c.b16 %v1169, %v1168
    %v1175 = vsel %vm140, %v1150, 0
    %1177 = vmatprep.subr.bf16.mxu0 0
    %1178 = vmatpush1.bf16.msra.mxu0 %v1170
    %1179 = vmatprep.subr.bf16.mxu0 0
    %1180 = vmatpush1.bf16.msra.mxu0 %v1171
    %1181 = vmatprep.subr.bf16.mxu0 0
    %1182 = vmatpush1.bf16.msra.mxu0 0
    %1183 = vmatprep.subr.bf16.mxu0 0
    %1184 = vmatpush1.bf16.msra.mxu0 0
    %1185 = vmatprep.subr.bf16.mxu0 0
    %1186 = vmatpush1.bf16.msra.mxu0 0
    %1187 = vmatprep.subr.bf16.mxu0 0
    %1188 = vmatpush1.bf16.msra.mxu0 0
    %1189 = vmatprep.subr.bf16.mxu0 0
    %1190 = vmatpush1.bf16.msra.mxu0 0
    %1191 = vmatprep.subr.bf16.mxu0 0
    %1192 = vmatpush1.bf16.msra.mxu0 0
    %1193 = vmatprep.subr.bf16.mxu0 0
    %1194 = vmatpush1.bf16.msra.mxu0 0
    %1195 = vmatprep.subr.bf16.mxu0 0
    %1196 = vmatpush1.bf16.msra.mxu0 0
    %1197 = vmatprep.subr.bf16.mxu0 0
    %1198 = vmatpush1.bf16.msra.mxu0 0
    %1199 = vmatprep.subr.bf16.mxu0 0
    %1200 = vmatpush1.bf16.msra.mxu0 0
    %1201 = vmatprep.subr.bf16.mxu0 0
    %1202 = vmatpush1.bf16.msra.mxu0 0
    %1203 = vmatprep.subr.bf16.mxu0 0
    %1204 = vmatpush1.bf16.msra.mxu0 0
    %1205 = vmatprep.subr.bf16.mxu0 0
    %1206 = vmatpush1.bf16.msra.mxu0 0
    %1207 = vmatprep.subr.bf16.mxu0 0
    %1208 = vmatpush1.bf16.msra.mxu0 0
    %1209 = vmatprep.mubr.bf16.mxu0 0
    %1210 = vmatmul.mubr.bf16.gmra.mrb[0].mxu0 %v1175
    %v1211 = vpop.f32.mrb[0].mxu0
    %v1212 = vadd.f32 %v1160, %v1211
    %v1213 = vpop.f32.mrb[0].mxu0
    %v1214 = vpop.f32.mrb[0].mxu0
    %v1215 = vpop.f32.mrb[0].mxu0
    %1216 = vdwg.mxu0
    %v1217 = vtanh.pop %v1212
    %v1218 = vpack.c.bf16 %v1217, %v1217
    %v1219 = vld [vmem:[%s6] sm:$0xf]
    %v1220 = vld [vmem:[%s6 + $0x4] sm:$0xf]
    %v1221 = vld [vmem:[%s6 + $0x8] sm:$0xf]
    %v1222 = vld [vmem:[%s6 + $0xc] sm:$0xf]
    %v1223 = vld [vmem:[%s7] sm:$0x1]
    %v1225 = vlaneseq
    %v1226 = vshrl.u32 %v1225, 7
    %v1227 = vsub.s32 0, %v1226
    %v1228 = vrot.slane %v1223, %v1227
    %v1234 = vunpack.c.l.b16 %v1219
    %v1235 = vunpack.c.l.b16 %v1220
    %v1236 = vunpack.c.l.b16 %v1221
    %v1237 = vunpack.c.l.b16 %v1222
    %v1238 = vpack.c.b16 %v1235, %v1234
    %v1239 = vpack.c.b16 %v1237, %v1236
    %v1243 = vsel %vm140, %v1218, 0
    %1245 = vmatprep.subr.bf16.mxu0 0
    %1246 = vmatpush1.bf16.msra.mxu0 %v1238
    %1247 = vmatprep.subr.bf16.mxu0 0
    %1248 = vmatpush1.bf16.msra.mxu0 %v1239
    %1249 = vmatprep.subr.bf16.mxu0 0
    %1250 = vmatpush1.bf16.msra.mxu0 0
    %1251 = vmatprep.subr.bf16.mxu0 0
    %1252 = vmatpush1.bf16.msra.mxu0 0
    %1253 = vmatprep.subr.bf16.mxu0 0
    %1254 = vmatpush1.bf16.msra.mxu0 0
    %1255 = vmatprep.subr.bf16.mxu0 0
    %1256 = vmatpush1.bf16.msra.mxu0 0
    %1257 = vmatprep.subr.bf16.mxu0 0
    %1258 = vmatpush1.bf16.msra.mxu0 0
    %1259 = vmatprep.subr.bf16.mxu0 0
    %1260 = vmatpush1.bf16.msra.mxu0 0
    %1261 = vmatprep.subr.bf16.mxu0 0
    %1262 = vmatpush1.bf16.msra.mxu0 0
    %1263 = vmatprep.subr.bf16.mxu0 0
    %1264 = vmatpush1.bf16.msra.mxu0 0
    %1265 = vmatprep.subr.bf16.mxu0 0
    %1266 = vmatpush1.bf16.msra.mxu0 0
    %1267 = vmatprep.subr.bf16.mxu0 0
    %1268 = vmatpush1.bf16.msra.mxu0 0
    %1269 = vmatprep.subr.bf16.mxu0 0
    %1270 = vmatpush1.bf16.msra.mxu0 0
    %1271 = vmatprep.subr.bf16.mxu0 0
    %1272 = vmatpush1.bf16.msra.mxu0 0
    %1273 = vmatprep.subr.bf16.mxu0 0
    %1274 = vmatpush1.bf16.msra.mxu0 0
    %1275 = vmatprep.subr.bf16.mxu0 0
    %1276 = vmatpush1.bf16.msra.mxu0 0
    %1277 = vmatprep.mubr.bf16.mxu0 0
    %1278 = vmatmul.mubr.bf16.gmra.mrb[0].mxu0 %v1243
    %v1279 = vpop.f32.mrb[0].mxu0
    %v1280 = vadd.f32 %v1228, %v1279
    %v1281 = vpop.f32.mrb[0].mxu0
    %v1282 = vpop.f32.mrb[0].mxu0
    %v1283 = vpop.f32.mrb[0].mxu0
    %1284 = vdwg.mxu0
    %vm1285 = vcmask 17408
    %1286 = vst.msk [vmem:[#allocation3] sm:$0x3] %vm1285, %v1280
    // Predicated region
    $region41: #{tpu_custom_call.1} parent=1 // pred_check
      _
    $region42: #{tpu_custom_call.1} parent=1 // pred_check_branch
      %1288 = sbr.rel (0) target = $region44
    $region43: #{tpu_custom_call.1} parent=1 // pred_region
      %s1290 = ssub.s32 32, 32
      %1291 = vsyncadd [#allocation4], %s1290
      %s1293 = sshll.u32 [#allocation3], 4
      %s1294 = int_to_ptr.vmem [resolvable:$true] %s1293
      %1296 = dma.vmem_to_hbm [thread:$0]  %s1294, 32, %s8, [#allocation4]
    $region44: #{tpu_custom_call.1} parent=1 // pred_fallthru
      _
    // Predicated region
    $region45: #{tpu_custom_call.1} parent=1 // pred_check
      _
    $region46: #{tpu_custom_call.1} parent=1 // pred_check_branch
      %1298 = sbr.rel (0) target = $region48
    $region47: #{tpu_custom_call.1} parent=1 // pred_region
      %1299 = dma.done [#allocation4], 32
    $region48: #{tpu_custom_call.1} parent=1 // pred_fallthru
      _
    %1300 = vsyncpa [#allocation4], 1

</llo_original>
